<compile_context>
chip_gen: v7x
topology: tpu7x:2x2x1
jax: 0.10.0
libtpu: 0.0.40
codegen_flags: <defaults>
</compile_context>

<pallas_src>
import math
import functools

import jax
import jax.numpy as jnp
from jax import lax
from jax.experimental import pallas as pl
from jax.experimental.pallas import tpu as pltpu

INF = 1e12  # matches LearnableLogOptimalTransport(inf=1e12)


def _round_up(x, m):
    return ((x + m - 1) // m) * m


def _lse(x, axis):
    m = jnp.max(x, axis=axis, keepdims=True)
    return m + jnp.log(jnp.sum(jnp.exp(x - m), axis=axis, keepdims=True))


def _matching_ot_kernel(alpha_ref, ref_f_ref, src_f_ref, row_valid_ref, col_valid_ref,
                        out_ref, *, num_iterations, feat_dim, dust_row, dust_col):
    """Per grid step: BB batch elements of scaled similarity + learnable-dustbin
    log-domain Sinkhorn.

    ref_f_ref:     (BB, Np, D)  bf16 features, zero-padded (dustbin slot + tile pad)
    src_f_ref:     (BB, Mp, D)  bf16
    row_valid_ref: (BB, Np, 1)  f32, 1.0 = valid (dustbin row valid, tile pad invalid)
    col_valid_ref: (BB, 1, Mp)  f32
    out_ref:       (BB, Np, Mp) f32 log assignment scores
    """
    ref_f = ref_f_ref[...]
    src_f = src_f_ref[...]
    row_valid = row_valid_ref[...]
    col_valid = col_valid_ref[...]
    alpha = alpha_ref[0, 0]

    bb, n_pad, _ = ref_f.shape
    m_pad = src_f.shape[1]

    # einsum('bnd,bmd->bnm') / sqrt(D) — batched MXU matmul, bf16 in / f32 acc
    scores = lax.dot_general(ref_f, src_f, (((2,), (2,)), ((0,), (0,))),
                             preferred_element_type=jnp.float32)
    scores = scores * (1.0 / math.sqrt(feat_dim))

    # hoisted masks (computed once per tile, reused across the Sinkhorn loop)
    row_idx = lax.broadcasted_iota(jnp.int32, (1, n_pad, 1), 1)
    col_idx = lax.broadcasted_iota(jnp.int32, (1, 1, m_pad), 2)
    is_dust_row = row_idx == dust_row
    is_dust_col = col_idx == dust_col
    row_invalid = row_valid < 0.5
    col_invalid = col_valid < 0.5

    # dustbin row/col get alpha; invalid (masked or tile-padding) rows/cols get -inf
    padded = jnp.where(jnp.logical_or(is_dust_row, is_dust_col), alpha, scores)
    padded = jnp.where(jnp.logical_or(row_invalid, col_invalid), -INF, padded)

    # marginals (tile-padding rows/cols are invalid, so sums match the unpadded problem)
    nvr = jnp.sum(row_valid, axis=1, keepdims=True) - 1.0   # (BB,1,1) valid ref rows
    nvc = jnp.sum(col_valid, axis=2, keepdims=True) - 1.0   # (BB,1,1) valid src cols
    norm = -jnp.log(nvr + nvc)

    log_mu = jnp.where(is_dust_row, jnp.log(nvc) + norm, norm)   # (BB, Np, 1)
    log_mu = jnp.where(row_invalid, -INF, log_mu)
    log_nu = jnp.where(is_dust_col, jnp.log(nvr) + norm, norm)   # (BB, 1, Mp)
    log_nu = jnp.where(col_invalid, -INF, log_nu)

    # log-domain Sinkhorn iterations
    def body(_, carry):
        u, v = carry
        u = log_mu - _lse(padded + v, axis=2)
        v = log_nu - _lse(padded + u, axis=1)
        return u, v

    u0 = jnp.zeros((bb, n_pad, 1), jnp.float32)
    v0 = jnp.zeros((bb, 1, m_pad), jnp.float32)
    u, v = lax.fori_loop(0, num_iterations, body, (u0, v0),
                         unroll=num_iterations <= 16)

    out_ref[...] = padded + u + v - norm


def _pick_block_b(b, n_pad, m_pad, d, *, vmem_budget=24 * 1024 * 1024, cap=16):
    """Largest per-grid-step batch count whose double-buffered tiles + temporaries
    fit comfortably in scoped VMEM."""
    in_bytes = (n_pad * d * 2 + m_pad * d * 2 + n_pad * 4 + m_pad * 4) * 2  # dbl-buf
    out_bytes = n_pad * m_pad * 4 * 2                                        # dbl-buf
    tmp_bytes = n_pad * m_pad * 4 * 4   # padded, scores, lse temporaries, output val
    per_elem = in_bytes + out_bytes + tmp_bytes
    bb = max(1, vmem_budget // max(per_elem, 1))
    return int(min(bb, b, cap))


def matching_scores_with_ot(ref_feats, src_feats, ref_masks, src_masks, alpha,
                            num_iterations, *, block_b=None):
    """einsum('bnd,bmd->bnm')/sqrt(D)  +  LearnableLogOptimalTransport.

    ref_feats: (B, N, D), src_feats: (B, M, D)
    ref_masks: (B, N) bool, src_masks: (B, M) bool
    returns (B, N+1, M+1) f32 log scores (dustbin last row/col).
    """
    b, n, d = ref_feats.shape
    m = src_feats.shape[1]
    np1, mp1 = n + 1, m + 1

    # hardware-tile padding: sublanes (8) on the row axis, lanes (128) on the col axis
    n_pad = _round_up(np1, 8)
    m_pad = _round_up(mp1, 128)
    bb = block_b if block_b is not None else _pick_block_b(b, n_pad, m_pad, d)
    bb = max(1, min(bb, b))
    b_pad = _round_up(b, bb)

    f32 = jnp.float32
    # features: bf16 for the MXU, zero-padded (dustbin slot + tile padding + batch pad)
    ref_fp = jnp.pad(ref_feats.astype(jnp.bfloat16),
                     ((0, b_pad - b), (0, n_pad - n), (0, 0)))
    src_fp = jnp.pad(src_feats.astype(jnp.bfloat16),
                     ((0, b_pad - b), (0, m_pad - m), (0, 0)))

    # validity masks: tile-padding rows/cols invalid so nvr/nvc are unchanged;
    # dummy batch-padding entries fully valid so their (discarded) math stays finite
    row_valid = jnp.concatenate([ref_masks.astype(f32), jnp.ones((b, 1), f32)], axis=1)
    row_valid = jnp.pad(row_valid, ((0, 0), (0, n_pad - np1)))
    col_valid = jnp.concatenate([src_masks.astype(f32), jnp.ones((b, 1), f32)], axis=1)
    col_valid = jnp.pad(col_valid, ((0, 0), (0, m_pad - mp1)))
    if b_pad > b:
        pad_rows = jnp.pad(jnp.ones((b_pad - b, np1), f32), ((0, 0), (0, n_pad - np1)))
        pad_cols = jnp.pad(jnp.ones((b_pad - b, mp1), f32), ((0, 0), (0, m_pad - mp1)))
        row_valid = jnp.concatenate([row_valid, pad_rows], axis=0)
        col_valid = jnp.concatenate([col_valid, pad_cols], axis=0)
    row_valid = row_valid[:, :, None]                 # (b_pad, n_pad, 1)
    col_valid = col_valid[:, None, :]                 # (b_pad, 1, m_pad)

    alpha_arr = jnp.asarray(alpha, f32).reshape(1, 1)

    kernel = functools.partial(_matching_ot_kernel,
                               num_iterations=num_iterations, feat_dim=d,
                               dust_row=n, dust_col=m)
    out = pl.pallas_call(
        kernel,
        out_shape=jax.ShapeDtypeStruct((b_pad, n_pad, m_pad), jnp.float32),
        grid_spec=pltpu.PrefetchScalarGridSpec(
            num_scalar_prefetch=0,
            grid=(b_pad // bb,),
            in_specs=[
                pl.BlockSpec(memory_space=pltpu.MemorySpace.SMEM),       # alpha
                pl.BlockSpec((bb, n_pad, d), lambda i: (i, 0, 0)),       # ref feats
                pl.BlockSpec((bb, m_pad, d), lambda i: (i, 0, 0)),       # src feats
                pl.BlockSpec((bb, n_pad, 1), lambda i: (i, 0, 0)),       # row valid
                pl.BlockSpec((bb, 1, m_pad), lambda i: (i, 0, 0)),       # col valid
            ],
            out_specs=pl.BlockSpec((bb, n_pad, m_pad), lambda i: (i, 0, 0)),
        ),
        compiler_params=pltpu.CompilerParams(
            dimension_semantics=("parallel",),
            vmem_limit_bytes=32 * 1024 * 1024),
    )(alpha_arr, ref_fp, src_fp, row_valid, col_valid)

    return out[:b, :np1, :mp1]


def _l2_normalize_kernel(x_ref, o_ref):
    x = x_ref[...].astype(jnp.float32)
    ss = jnp.sum(x * x, axis=-1, keepdims=True)
    # F.normalize(p=2, dim=1, eps=1e-12): x / max(||x||, eps)  ==  x * rsqrt(max(ss, eps^2))
    o_ref[...] = (x * lax.rsqrt(jnp.maximum(ss, 1e-24))).astype(o_ref.dtype)


def l2_normalize(x, *, tile_n=512):
    """F.normalize(x, p=2, dim=1) for a (N, D) feature matrix, tiled along N."""
    n, d = x.shape
    n8 = _round_up(n, 8)
    tile = min(tile_n, n8)
    n_pad = _round_up(n, tile)
    xp = jnp.pad(x, ((0, n_pad - n), (0, 0)))
    out = pl.pallas_call(
        _l2_normalize_kernel,
        out_shape=jax.ShapeDtypeStruct((n_pad, d), x.dtype),
        grid=(n_pad // tile,),
        in_specs=[pl.BlockSpec((tile, d), lambda i: (i, 0))],
        out_specs=pl.BlockSpec((tile, d), lambda i: (i, 0)),
        compiler_params=pltpu.CompilerParams(
            dimension_semantics=("parallel",),
            vmem_limit_bytes=32 * 1024 * 1024),
    )(xp)
    return out[:n]


# -------------------- plain-JAX reference (for verification only) --------------------
def _ot_reference(ref_feats, src_feats, ref_masks, src_masks, alpha, num_iterations):
    b, n, d = ref_feats.shape
    m = src_feats.shape[1]
    scores = jnp.einsum('bnd,bmd->bnm', ref_feats, src_feats) / math.sqrt(d)
    padded = jnp.full((b, n + 1, m + 1), alpha, jnp.float32)
    padded = padded.at[:, :n, :m].set(scores)
    row_valid = jnp.concatenate([ref_masks, jnp.ones((b, 1), bool)], axis=1)
    col_valid = jnp.concatenate([src_masks, jnp.ones((b, 1), bool)], axis=1)
    invalid = (~row_valid)[:, :, None] | (~col_valid)[:, None, :]
    padded = jnp.where(invalid, -INF, padded)
    nvr = jnp.sum(ref_masks, axis=1).astype(jnp.float32)
    nvc = jnp.sum(src_masks, axis=1).astype(jnp.float32)
    norm = -jnp.log(nvr + nvc)
    log_mu = jnp.concatenate(
        [jnp.broadcast_to(norm[:, None], (b, n)), (jnp.log(nvc) + norm)[:, None]], axis=1)
    log_mu = jnp.where(row_valid, log_mu, -INF)
    log_nu = jnp.concatenate(
        [jnp.broadcast_to(norm[:, None], (b, m)), (jnp.log(nvr) + norm)[:, None]], axis=1)
    log_nu = jnp.where(col_valid, log_nu, -INF)
    u = jnp.zeros((b, n + 1), jnp.float32)
    v = jnp.zeros((b, m + 1), jnp.float32)
    for _ in range(num_iterations):
        u = log_mu - jax.nn.logsumexp(padded + v[:, None, :], axis=2)
        v = log_nu - jax.nn.logsumexp(padded + u[:, :, None], axis=1)
    return padded + u[:, :, None] + v[:, None, :] - norm[:, None, None]


# TODO(synk): KPConvFPN backbone, InitialTransformer, GeometricTransformer,
#   point_to_node_partition, get_node_correspondences, SuperPointMatching,
#   LocalGlobalRegistration and the variable-length NMS anchor loop are external
#   submodules / data-dependent host loops with no definition in the provided module;
#   only the inline forward() compute (scaled matching einsum + learnable log-OT +
#   L2 normalization) is implemented as Pallas kernels here.


if __name__ == "__main__":
    key = jax.random.PRNGKey(0)
    k1, k2, k3, k4 = jax.random.split(key, 4)

    # deterministic "parameter" init: LearnableLogOptimalTransport.alpha = 1.0
    alpha = 1.0
    num_sinkhorn_iterations = 10

    # ----- coarse stage: node features after the geometric transformer -----
    B_c, N_c, M_c, D_c = 1, 16, 16, 32          # 1 scene, 16 ref / 16 src superpoints
    ref_feats_c = jax.random.normal(k1, (B_c, N_c, D_c), jnp.float32)
    src_feats_c = jax.random.normal(k2, (B_c, M_c, D_c), jnp.float32)
    ref_node_masks = jnp.arange(N_c)[None, :] < 14     # last 2 ref nodes empty
    src_node_masks = jnp.arange(M_c)[None, :] < 15     # last src node empty

    coarse_ot = matching_scores_with_ot(ref_feats_c, src_feats_c,
                                        ref_node_masks, src_node_masks,
                                        alpha, num_sinkhorn_iterations)
    coarse_ot = jax.block_until_ready(coarse_ot)
    # forward(): matching_scores = exp(OT[:, :-1, :-1])  (glue)
    coarse_probs = jnp.exp(coarse_ot[:, :-1, :-1])

    # forward(): ref/src_feats_c_norm = F.normalize(feats_c, p=2, dim=1)
    ref_feats_c_norm = jax.block_until_ready(l2_normalize(ref_feats_c[0]))
    src_feats_c_norm = jax.block_until_ready(l2_normalize(src_feats_c[0]))

    # ----- fine stage: per-correspondence patch matching -----
    B_f, K, D_f = 4, 16, 32                     # 4 node correspondences, 16 knn pts each
    ref_knn_feats = jax.random.normal(k3, (B_f, K, D_f), jnp.float32)
    src_knn_feats = jax.random.normal(k4, (B_f, K, D_f), jnp.float32)
    ref_knn_masks = jax.random.uniform(k3, (B_f, K)) > 0.2
    src_knn_masks = jax.random.uniform(k4, (B_f, K)) > 0.2

    fine_ot = matching_scores_with_ot(ref_knn_feats, src_knn_feats,
                                      ref_knn_masks, src_knn_masks,
                                      alpha, num_sinkhorn_iterations)
    fine_ot = jax.block_until_ready(fine_ot)

    # ----- verify against plain-JAX f32 reference of the PyTorch semantics -----
    # (kernel intentionally feeds the MXU bf16 features, so use a mixed-precision
    #  tolerance for the OT outputs)
    ref_coarse = _ot_reference(ref_feats_c, src_feats_c, ref_node_masks, src_node_masks,
                               alpha, num_sinkhorn_iterations)
    ref_fine = _ot_reference(ref_knn_feats, src_knn_feats, ref_knn_masks, src_knn_masks,
                             alpha, num_sinkhorn_iterations)
    nrm = jnp.sqrt(jnp.sum(ref_feats_c[0] ** 2, axis=-1, keepdims=True))
    ref_norm = ref_feats_c[0] / jnp.maximum(nrm, 1e-12)

    ok = bool(jnp.allclose(coarse_ot, ref_coarse, rtol=5e-2, atol=5e-2)) \
        and bool(jnp.allclose(fine_ot, ref_fine, rtol=5e-2, atol=5e-2)) \
        and bool(jnp.allclose(ref_feats_c_norm, ref_norm, rtol=1e-3, atol=1e-3)) \
        and bool(jnp.all(jnp.isfinite(coarse_probs)))

    if not ok:
        raise AssertionError("Pallas GeoTransformer kernels mismatch reference")
    print("KERNEL_OK")
</pallas_src>

<mosaic_0001>
module attributes {stable_mosaic.version = 11 : i64} {
  func.func @_matching_ot_kernel(%arg0: i32, %arg1: memref<1x1xf32, #tpu.memory_space<smem>>, %arg2: memref<1x24x32xbf16, #tpu.memory_space<vmem>>, %arg3: memref<1x128x32xbf16, #tpu.memory_space<vmem>>, %arg4: memref<1x24x1xf32, #tpu.memory_space<vmem>>, %arg5: memref<1x1x128xf32, #tpu.memory_space<vmem>>, %arg6: memref<1x24x128xf32, #tpu.memory_space<vmem>>) attributes {dimension_semantics = [#tpu.dimension_semantics<parallel>], iteration_bounds = array<i64: 1>, scalar_prefetch = 0 : i64, scratch_operands = 0 : i64, tpu.core_type = #tpu.core_type<tc>, window_params = [{transform_indices = @transform_0, window_bounds = array<i64: 1, 1>}, {transform_indices = @transform_1, window_bounds = array<i64: 1, 24, 32>}, {transform_indices = @transform_2, window_bounds = array<i64: 1, 128, 32>}, {transform_indices = @transform_3, window_bounds = array<i64: 1, 24, 1>}, {transform_indices = @transform_4, window_bounds = array<i64: 1, 1, 128>}, {transform_indices = @transform_5, window_bounds = array<i64: 1, 24, 128>}]} {
    %c0 = arith.constant 0 : index
    %c0_0 = arith.constant 0 : index
    %c0_1 = arith.constant 0 : index
    %0 = vector.load %arg2[%c0, %c0_0, %c0_1] : memref<1x24x32xbf16, #tpu.memory_space<vmem>>, vector<1x24x32xbf16>
    %c0_2 = arith.constant 0 : index
    %c0_3 = arith.constant 0 : index
    %c0_4 = arith.constant 0 : index
    %1 = vector.load %arg3[%c0_2, %c0_3, %c0_4] : memref<1x128x32xbf16, #tpu.memory_space<vmem>>, vector<1x128x32xbf16>
    %c0_5 = arith.constant 0 : index
    %c0_6 = arith.constant 0 : index
    %c0_7 = arith.constant 0 : index
    %2 = vector.load %arg4[%c0_5, %c0_6, %c0_7] : memref<1x24x1xf32, #tpu.memory_space<vmem>>, vector<1x24x1xf32>
    %c0_8 = arith.constant 0 : index
    %c0_9 = arith.constant 0 : index
    %c0_10 = arith.constant 0 : index
    %3 = vector.load %arg5[%c0_8, %c0_9, %c0_10] : memref<1x1x128xf32, #tpu.memory_space<vmem>>, vector<1x1x128xf32>
    %c0_11 = arith.constant 0 : index
    %c0_12 = arith.constant 0 : index
    %4 = memref.load %arg1[%c0_11, %c0_12] : memref<1x1xf32, #tpu.memory_space<smem>>
    %cst = arith.constant dense<0.000000e+00> : vector<1x24x128xf32>
    %5 = tpu.matmul %0, %1, %cst {dimension_numbers = #tpu.dot_dimension_numbers<[2], [2], [1], [1], [0, 0, 0, 1, 1, 1], [0], [0]>} : vector<1x24x32xbf16>, vector<1x128x32xbf16>, vector<1x24x128xf32> -> vector<1x24x128xf32>
    %cst_13 = arith.constant 0.176776692 : f32
    %6 = vector.broadcast %cst_13 : f32 to vector<1x24x128xf32>
    %7 = arith.mulf %5, %6 : vector<1x24x128xf32>
    %8 = tpu.iota {dimensions = array<i32: 1>} : vector<1x24x1xi32>
    %9 = tpu.iota {dimensions = array<i32: 2>} : vector<1x1x128xi32>
    %c16_i32 = arith.constant 16 : i32
    %10 = vector.broadcast %c16_i32 : i32 to vector<1x24x1xi32>
    %11 = arith.cmpi eq, %8, %10 : vector<1x24x1xi32>
    %c16_i32_14 = arith.constant 16 : i32
    %12 = vector.broadcast %c16_i32_14 : i32 to vector<1x1x128xi32>
    %13 = arith.cmpi eq, %9, %12 : vector<1x1x128xi32>
    %cst_15 = arith.constant 5.000000e-01 : f32
    %14 = vector.broadcast %cst_15 : f32 to vector<1x24x1xf32>
    %15 = arith.cmpf olt, %2, %14 : vector<1x24x1xf32>
    %cst_16 = arith.constant 5.000000e-01 : f32
    %16 = vector.broadcast %cst_16 : f32 to vector<1x1x128xf32>
    %17 = arith.cmpf olt, %3, %16 : vector<1x1x128xf32>
    %18 = vector.broadcast %11 : vector<1x24x1xi1> to vector<1x24x128xi1>
    %19 = vector.broadcast %13 : vector<1x1x128xi1> to vector<1x24x128xi1>
    %20 = arith.ori %18, %19 : vector<1x24x128xi1>
    %21 = vector.broadcast %4 : f32 to vector<1x24x128xf32>
    %22 = arith.select %20, %21, %7 : vector<1x24x128xi1>, vector<1x24x128xf32>
    %23 = vector.broadcast %15 : vector<1x24x1xi1> to vector<1x24x128xi1>
    %24 = vector.broadcast %17 : vector<1x1x128xi1> to vector<1x24x128xi1>
    %25 = arith.ori %23, %24 : vector<1x24x128xi1>
    %cst_17 = arith.constant -9.99999995E+11 : f32
    %26 = vector.broadcast %cst_17 : f32 to vector<1x24x128xf32>
    %27 = arith.select %25, %26, %22 : vector<1x24x128xi1>, vector<1x24x128xf32>
    %cst_18 = arith.constant dense<0.000000e+00> : vector<1x1xf32>
    %28 = vector.multi_reduction <add>, %2, %cst_18 [1] : vector<1x24x1xf32> to vector<1x1xf32>
    %29 = vector.shape_cast %28 : vector<1x1xf32> to vector<1x1x1xf32>
    %cst_19 = arith.constant 1.000000e+00 : f32
    %30 = vector.broadcast %cst_19 : f32 to vector<1x1x1xf32>
    %31 = arith.subf %29, %30 : vector<1x1x1xf32>
    %cst_20 = arith.constant dense<0.000000e+00> : vector<1x1xf32>
    %32 = vector.multi_reduction <add>, %3, %cst_20 [2] : vector<1x1x128xf32> to vector<1x1xf32>
    %33 = vector.shape_cast %32 : vector<1x1xf32> to vector<1x1x1xf32>
    %cst_21 = arith.constant 1.000000e+00 : f32
    %34 = vector.broadcast %cst_21 : f32 to vector<1x1x1xf32>
    %35 = arith.subf %33, %34 : vector<1x1x1xf32>
    %36 = arith.addf %31, %35 : vector<1x1x1xf32>
    %37 = math.log %36 : vector<1x1x1xf32>
    %cst_22 = arith.constant 0.000000e+00 : f32
    %38 = vector.broadcast %cst_22 : f32 to vector<1x1x1xf32>
    %39 = arith.subf %38, %37 : vector<1x1x1xf32>
    %40 = math.log %35 : vector<1x1x1xf32>
    %41 = arith.addf %40, %39 : vector<1x1x1xf32>
    %42 = vector.shape_cast %41 : vector<1x1x1xf32> to vector<1x1x1xf32>
    %43 = vector.broadcast %42 : vector<1x1x1xf32> to vector<1x24x1xf32>
    %44 = vector.shape_cast %39 : vector<1x1x1xf32> to vector<1x1x1xf32>
    %45 = vector.broadcast %44 : vector<1x1x1xf32> to vector<1x24x1xf32>
    %46 = arith.select %11, %43, %45 : vector<1x24x1xi1>, vector<1x24x1xf32>
    %cst_23 = arith.constant -9.99999995E+11 : f32
    %47 = vector.broadcast %cst_23 : f32 to vector<1x24x1xf32>
    %48 = arith.select %15, %47, %46 : vector<1x24x1xi1>, vector<1x24x1xf32>
    %49 = math.log %31 : vector<1x1x1xf32>
    %50 = arith.addf %49, %39 : vector<1x1x1xf32>
    %51 = vector.shape_cast %50 : vector<1x1x1xf32> to vector<1x1x1xf32>
    %52 = vector.broadcast %51 : vector<1x1x1xf32> to vector<1x1x128xf32>
    %53 = vector.shape_cast %39 : vector<1x1x1xf32> to vector<1x1x1xf32>
    %54 = vector.broadcast %53 : vector<1x1x1xf32> to vector<1x1x128xf32>
    %55 = arith.select %13, %52, %54 : vector<1x1x128xi1>, vector<1x1x128xf32>
    %cst_24 = arith.constant -9.99999995E+11 : f32
    %56 = vector.broadcast %cst_24 : f32 to vector<1x1x128xf32>
    %57 = arith.select %17, %56, %55 : vector<1x1x128xi1>, vector<1x1x128xf32>
    %cst_25 = arith.constant 0.000000e+00 : f32
    %58 = vector.broadcast %cst_25 : f32 to vector<1x24x1xf32>
    %cst_26 = arith.constant 0.000000e+00 : f32
    %59 = vector.broadcast %cst_26 : f32 to vector<1x1x128xf32>
    %c0_i32 = arith.constant 0 : i32
    %60 = vector.broadcast %59 : vector<1x1x128xf32> to vector<1x24x128xf32>
    %61 = arith.addf %27, %60 : vector<1x24x128xf32>
    %cst_27 = arith.constant dense<0xFF800000> : vector<1x24xf32>
    %62 = vector.multi_reduction <maximumf>, %61, %cst_27 [2] : vector<1x24x128xf32> to vector<1x24xf32>
    %63 = vector.shape_cast %62 : vector<1x24xf32> to vector<1x24x1xf32>
    %64 = vector.broadcast %63 : vector<1x24x1xf32> to vector<1x24x128xf32>
    %65 = arith.subf %61, %64 : vector<1x24x128xf32>
    %66 = math.exp %65 : vector<1x24x128xf32>
    %cst_28 = arith.constant dense<0.000000e+00> : vector<1x24xf32>
    %67 = vector.multi_reduction <add>, %66, %cst_28 [2] : vector<1x24x128xf32> to vector<1x24xf32>
    %68 = vector.shape_cast %67 : vector<1x24xf32> to vector<1x24x1xf32>
    %69 = math.log %68 : vector<1x24x1xf32>
    %70 = arith.addf %63, %69 : vector<1x24x1xf32>
    %71 = arith.subf %48, %70 : vector<1x24x1xf32>
    %72 = vector.broadcast %71 : vector<1x24x1xf32> to vector<1x24x128xf32>
    %73 = arith.addf %27, %72 : vector<1x24x128xf32>
    %cst_29 = arith.constant dense<0xFF800000> : vector<1x128xf32>
    %74 = vector.multi_reduction <maximumf>, %73, %cst_29 [1] : vector<1x24x128xf32> to vector<1x128xf32>
    %75 = vector.shape_cast %74 : vector<1x128xf32> to vector<1x1x128xf32>
    %76 = vector.broadcast %75 : vector<1x1x128xf32> to vector<1x24x128xf32>
    %77 = arith.subf %73, %76 : vector<1x24x128xf32>
    %78 = math.exp %77 : vector<1x24x128xf32>
    %cst_30 = arith.constant dense<0.000000e+00> : vector<1x128xf32>
    %79 = vector.multi_reduction <add>, %78, %cst_30 [1] : vector<1x24x128xf32> to vector<1x128xf32>
    %80 = vector.shape_cast %79 : vector<1x128xf32> to vector<1x1x128xf32>
    %81 = math.log %80 : vector<1x1x128xf32>
    %82 = arith.addf %75, %81 : vector<1x1x128xf32>
    %83 = arith.subf %57, %82 : vector<1x1x128xf32>
    %c1_i32 = arith.constant 1 : i32
    %84 = vector.broadcast %83 : vector<1x1x128xf32> to vector<1x24x128xf32>
    %85 = arith.addf %27, %84 : vector<1x24x128xf32>
    %cst_31 = arith.constant dense<0xFF800000> : vector<1x24xf32>
    %86 = vector.multi_reduction <maximumf>, %85, %cst_31 [2] : vector<1x24x128xf32> to vector<1x24xf32>
    %87 = vector.shape_cast %86 : vector<1x24xf32> to vector<1x24x1xf32>
    %88 = vector.broadcast %87 : vector<1x24x1xf32> to vector<1x24x128xf32>
    %89 = arith.subf %85, %88 : vector<1x24x128xf32>
    %90 = math.exp %89 : vector<1x24x128xf32>
    %cst_32 = arith.constant dense<0.000000e+00> : vector<1x24xf32>
    %91 = vector.multi_reduction <add>, %90, %cst_32 [2] : vector<1x24x128xf32> to vector<1x24xf32>
    %92 = vector.shape_cast %91 : vector<1x24xf32> to vector<1x24x1xf32>
    %93 = math.log %92 : vector<1x24x1xf32>
    %94 = arith.addf %87, %93 : vector<1x24x1xf32>
    %95 = arith.subf %48, %94 : vector<1x24x1xf32>
    %96 = vector.broadcast %95 : vector<1x24x1xf32> to vector<1x24x128xf32>
    %97 = arith.addf %27, %96 : vector<1x24x128xf32>
    %cst_33 = arith.constant dense<0xFF800000> : vector<1x128xf32>
    %98 = vector.multi_reduction <maximumf>, %97, %cst_33 [1] : vector<1x24x128xf32> to vector<1x128xf32>
    %99 = vector.shape_cast %98 : vector<1x128xf32> to vector<1x1x128xf32>
    %100 = vector.broadcast %99 : vector<1x1x128xf32> to vector<1x24x128xf32>
    %101 = arith.subf %97, %100 : vector<1x24x128xf32>
    %102 = math.exp %101 : vector<1x24x128xf32>
    %cst_34 = arith.constant dense<0.000000e+00> : vector<1x128xf32>
    %103 = vector.multi_reduction <add>, %102, %cst_34 [1] : vector<1x24x128xf32> to vector<1x128xf32>
    %104 = vector.shape_cast %103 : vector<1x128xf32> to vector<1x1x128xf32>
    %105 = math.log %104 : vector<1x1x128xf32>
    %106 = arith.addf %99, %105 : vector<1x1x128xf32>
    %107 = arith.subf %57, %106 : vector<1x1x128xf32>
    %c2_i32 = arith.constant 2 : i32
    %108 = vector.broadcast %107 : vector<1x1x128xf32> to vector<1x24x128xf32>
    %109 = arith.addf %27, %108 : vector<1x24x128xf32>
    %cst_35 = arith.constant dense<0xFF800000> : vector<1x24xf32>
    %110 = vector.multi_reduction <maximumf>, %109, %cst_35 [2] : vector<1x24x128xf32> to vector<1x24xf32>
    %111 = vector.shape_cast %110 : vector<1x24xf32> to vector<1x24x1xf32>
    %112 = vector.broadcast %111 : vector<1x24x1xf32> to vector<1x24x128xf32>
    %113 = arith.subf %109, %112 : vector<1x24x128xf32>
    %114 = math.exp %113 : vector<1x24x128xf32>
    %cst_36 = arith.constant dense<0.000000e+00> : vector<1x24xf32>
    %115 = vector.multi_reduction <add>, %114, %cst_36 [2] : vector<1x24x128xf32> to vector<1x24xf32>
    %116 = vector.shape_cast %115 : vector<1x24xf32> to vector<1x24x1xf32>
    %117 = math.log %116 : vector<1x24x1xf32>
    %118 = arith.addf %111, %117 : vector<1x24x1xf32>
    %119 = arith.subf %48, %118 : vector<1x24x1xf32>
    %120 = vector.broadcast %119 : vector<1x24x1xf32> to vector<1x24x128xf32>
    %121 = arith.addf %27, %120 : vector<1x24x128xf32>
    %cst_37 = arith.constant dense<0xFF800000> : vector<1x128xf32>
    %122 = vector.multi_reduction <maximumf>, %121, %cst_37 [1] : vector<1x24x128xf32> to vector<1x128xf32>
    %123 = vector.shape_cast %122 : vector<1x128xf32> to vector<1x1x128xf32>
    %124 = vector.broadcast %123 : vector<1x1x128xf32> to vector<1x24x128xf32>
    %125 = arith.subf %121, %124 : vector<1x24x128xf32>
    %126 = math.exp %125 : vector<1x24x128xf32>
    %cst_38 = arith.constant dense<0.000000e+00> : vector<1x128xf32>
    %127 = vector.multi_reduction <add>, %126, %cst_38 [1] : vector<1x24x128xf32> to vector<1x128xf32>
    %128 = vector.shape_cast %127 : vector<1x128xf32> to vector<1x1x128xf32>
    %129 = math.log %128 : vector<1x1x128xf32>
    %130 = arith.addf %123, %129 : vector<1x1x128xf32>
    %131 = arith.subf %57, %130 : vector<1x1x128xf32>
    %c3_i32 = arith.constant 3 : i32
    %132 = vector.broadcast %131 : vector<1x1x128xf32> to vector<1x24x128xf32>
    %133 = arith.addf %27, %132 : vector<1x24x128xf32>
    %cst_39 = arith.constant dense<0xFF800000> : vector<1x24xf32>
    %134 = vector.multi_reduction <maximumf>, %133, %cst_39 [2] : vector<1x24x128xf32> to vector<1x24xf32>
    %135 = vector.shape_cast %134 : vector<1x24xf32> to vector<1x24x1xf32>
    %136 = vector.broadcast %135 : vector<1x24x1xf32> to vector<1x24x128xf32>
    %137 = arith.subf %133, %136 : vector<1x24x128xf32>
    %138 = math.exp %137 : vector<1x24x128xf32>
    %cst_40 = arith.constant dense<0.000000e+00> : vector<1x24xf32>
    %139 = vector.multi_reduction <add>, %138, %cst_40 [2] : vector<1x24x128xf32> to vector<1x24xf32>
    %140 = vector.shape_cast %139 : vector<1x24xf32> to vector<1x24x1xf32>
    %141 = math.log %140 : vector<1x24x1xf32>
    %142 = arith.addf %135, %141 : vector<1x24x1xf32>
    %143 = arith.subf %48, %142 : vector<1x24x1xf32>
    %144 = vector.broadcast %143 : vector<1x24x1xf32> to vector<1x24x128xf32>
    %145 = arith.addf %27, %144 : vector<1x24x128xf32>
    %cst_41 = arith.constant dense<0xFF800000> : vector<1x128xf32>
    %146 = vector.multi_reduction <maximumf>, %145, %cst_41 [1] : vector<1x24x128xf32> to vector<1x128xf32>
    %147 = vector.shape_cast %146 : vector<1x128xf32> to vector<1x1x128xf32>
    %148 = vector.broadcast %147 : vector<1x1x128xf32> to vector<1x24x128xf32>
    %149 = arith.subf %145, %148 : vector<1x24x128xf32>
    %150 = math.exp %149 : vector<1x24x128xf32>
    %cst_42 = arith.constant dense<0.000000e+00> : vector<1x128xf32>
    %151 = vector.multi_reduction <add>, %150, %cst_42 [1] : vector<1x24x128xf32> to vector<1x128xf32>
    %152 = vector.shape_cast %151 : vector<1x128xf32> to vector<1x1x128xf32>
    %153 = math.log %152 : vector<1x1x128xf32>
    %154 = arith.addf %147, %153 : vector<1x1x128xf32>
    %155 = arith.subf %57, %154 : vector<1x1x128xf32>
    %c4_i32 = arith.constant 4 : i32
    %156 = vector.broadcast %155 : vector<1x1x128xf32> to vector<1x24x128xf32>
    %157 = arith.addf %27, %156 : vector<1x24x128xf32>
    %cst_43 = arith.constant dense<0xFF800000> : vector<1x24xf32>
    %158 = vector.multi_reduction <maximumf>, %157, %cst_43 [2] : vector<1x24x128xf32> to vector<1x24xf32>
    %159 = vector.shape_cast %158 : vector<1x24xf32> to vector<1x24x1xf32>
    %160 = vector.broadcast %159 : vector<1x24x1xf32> to vector<1x24x128xf32>
    %161 = arith.subf %157, %160 : vector<1x24x128xf32>
    %162 = math.exp %161 : vector<1x24x128xf32>
    %cst_44 = arith.constant dense<0.000000e+00> : vector<1x24xf32>
    %163 = vector.multi_reduction <add>, %162, %cst_44 [2] : vector<1x24x128xf32> to vector<1x24xf32>
    %164 = vector.shape_cast %163 : vector<1x24xf32> to vector<1x24x1xf32>
    %165 = math.log %164 : vector<1x24x1xf32>
    %166 = arith.addf %159, %165 : vector<1x24x1xf32>
    %167 = arith.subf %48, %166 : vector<1x24x1xf32>
    %168 = vector.broadcast %167 : vector<1x24x1xf32> to vector<1x24x128xf32>
    %169 = arith.addf %27, %168 : vector<1x24x128xf32>
    %cst_45 = arith.constant dense<0xFF800000> : vector<1x128xf32>
    %170 = vector.multi_reduction <maximumf>, %169, %cst_45 [1] : vector<1x24x128xf32> to vector<1x128xf32>
    %171 = vector.shape_cast %170 : vector<1x128xf32> to vector<1x1x128xf32>
    %172 = vector.broadcast %171 : vector<1x1x128xf32> to vector<1x24x128xf32>
    %173 = arith.subf %169, %172 : vector<1x24x128xf32>
    %174 = math.exp %173 : vector<1x24x128xf32>
    %cst_46 = arith.constant dense<0.000000e+00> : vector<1x128xf32>
    %175 = vector.multi_reduction <add>, %174, %cst_46 [1] : vector<1x24x128xf32> to vector<1x128xf32>
    %176 = vector.shape_cast %175 : vector<1x128xf32> to vector<1x1x128xf32>
    %177 = math.log %176 : vector<1x1x128xf32>
    %178 = arith.addf %171, %177 : vector<1x1x128xf32>
    %179 = arith.subf %57, %178 : vector<1x1x128xf32>
    %c5_i32 = arith.constant 5 : i32
    %180 = vector.broadcast %179 : vector<1x1x128xf32> to vector<1x24x128xf32>
    %181 = arith.addf %27, %180 : vector<1x24x128xf32>
    %cst_47 = arith.constant dense<0xFF800000> : vector<1x24xf32>
    %182 = vector.multi_reduction <maximumf>, %181, %cst_47 [2] : vector<1x24x128xf32> to vector<1x24xf32>
    %183 = vector.shape_cast %182 : vector<1x24xf32> to vector<1x24x1xf32>
    %184 = vector.broadcast %183 : vector<1x24x1xf32> to vector<1x24x128xf32>
    %185 = arith.subf %181, %184 : vector<1x24x128xf32>
    %186 = math.exp %185 : vector<1x24x128xf32>
    %cst_48 = arith.constant dense<0.000000e+00> : vector<1x24xf32>
    %187 = vector.multi_reduction <add>, %186, %cst_48 [2] : vector<1x24x128xf32> to vector<1x24xf32>
    %188 = vector.shape_cast %187 : vector<1x24xf32> to vector<1x24x1xf32>
    %189 = math.log %188 : vector<1x24x1xf32>
    %190 = arith.addf %183, %189 : vector<1x24x1xf32>
    %191 = arith.subf %48, %190 : vector<1x24x1xf32>
    %192 = vector.broadcast %191 : vector<1x24x1xf32> to vector<1x24x128xf32>
    %193 = arith.addf %27, %192 : vector<1x24x128xf32>
    %cst_49 = arith.constant dense<0xFF800000> : vector<1x128xf32>
    %194 = vector.multi_reduction <maximumf>, %193, %cst_49 [1] : vector<1x24x128xf32> to vector<1x128xf32>
    %195 = vector.shape_cast %194 : vector<1x128xf32> to vector<1x1x128xf32>
    %196 = vector.broadcast %195 : vector<1x1x128xf32> to vector<1x24x128xf32>
    %197 = arith.subf %193, %196 : vector<1x24x128xf32>
    %198 = math.exp %197 : vector<1x24x128xf32>
    %cst_50 = arith.constant dense<0.000000e+00> : vector<1x128xf32>
    %199 = vector.multi_reduction <add>, %198, %cst_50 [1] : vector<1x24x128xf32> to vector<1x128xf32>
    %200 = vector.shape_cast %199 : vector<1x128xf32> to vector<1x1x128xf32>
    %201 = math.log %200 : vector<1x1x128xf32>
    %202 = arith.addf %195, %201 : vector<1x1x128xf32>
    %203 = arith.subf %57, %202 : vector<1x1x128xf32>
    %c6_i32 = arith.constant 6 : i32
    %204 = vector.broadcast %203 : vector<1x1x128xf32> to vector<1x24x128xf32>
    %205 = arith.addf %27, %204 : vector<1x24x128xf32>
    %cst_51 = arith.constant dense<0xFF800000> : vector<1x24xf32>
    %206 = vector.multi_reduction <maximumf>, %205, %cst_51 [2] : vector<1x24x128xf32> to vector<1x24xf32>
    %207 = vector.shape_cast %206 : vector<1x24xf32> to vector<1x24x1xf32>
    %208 = vector.broadcast %207 : vector<1x24x1xf32> to vector<1x24x128xf32>
    %209 = arith.subf %205, %208 : vector<1x24x128xf32>
    %210 = math.exp %209 : vector<1x24x128xf32>
    %cst_52 = arith.constant dense<0.000000e+00> : vector<1x24xf32>
    %211 = vector.multi_reduction <add>, %210, %cst_52 [2] : vector<1x24x128xf32> to vector<1x24xf32>
    %212 = vector.shape_cast %211 : vector<1x24xf32> to vector<1x24x1xf32>
    %213 = math.log %212 : vector<1x24x1xf32>
    %214 = arith.addf %207, %213 : vector<1x24x1xf32>
    %215 = arith.subf %48, %214 : vector<1x24x1xf32>
    %216 = vector.broadcast %215 : vector<1x24x1xf32> to vector<1x24x128xf32>
    %217 = arith.addf %27, %216 : vector<1x24x128xf32>
    %cst_53 = arith.constant dense<0xFF800000> : vector<1x128xf32>
    %218 = vector.multi_reduction <maximumf>, %217, %cst_53 [1] : vector<1x24x128xf32> to vector<1x128xf32>
    %219 = vector.shape_cast %218 : vector<1x128xf32> to vector<1x1x128xf32>
    %220 = vector.broadcast %219 : vector<1x1x128xf32> to vector<1x24x128xf32>
    %221 = arith.subf %217, %220 : vector<1x24x128xf32>
    %222 = math.exp %221 : vector<1x24x128xf32>
    %cst_54 = arith.constant dense<0.000000e+00> : vector<1x128xf32>
    %223 = vector.multi_reduction <add>, %222, %cst_54 [1] : vector<1x24x128xf32> to vector<1x128xf32>
    %224 = vector.shape_cast %223 : vector<1x128xf32> to vector<1x1x128xf32>
    %225 = math.log %224 : vector<1x1x128xf32>
    %226 = arith.addf %219, %225 : vector<1x1x128xf32>
    %227 = arith.subf %57, %226 : vector<1x1x128xf32>
    %c7_i32 = arith.constant 7 : i32
    %228 = vector.broadcast %227 : vector<1x1x128xf32> to vector<1x24x128xf32>
    %229 = arith.addf %27, %228 : vector<1x24x128xf32>
    %cst_55 = arith.constant dense<0xFF800000> : vector<1x24xf32>
    %230 = vector.multi_reduction <maximumf>, %229, %cst_55 [2] : vector<1x24x128xf32> to vector<1x24xf32>
    %231 = vector.shape_cast %230 : vector<1x24xf32> to vector<1x24x1xf32>
    %232 = vector.broadcast %231 : vector<1x24x1xf32> to vector<1x24x128xf32>
    %233 = arith.subf %229, %232 : vector<1x24x128xf32>
    %234 = math.exp %233 : vector<1x24x128xf32>
    %cst_56 = arith.constant dense<0.000000e+00> : vector<1x24xf32>
    %235 = vector.multi_reduction <add>, %234, %cst_56 [2] : vector<1x24x128xf32> to vector<1x24xf32>
    %236 = vector.shape_cast %235 : vector<1x24xf32> to vector<1x24x1xf32>
    %237 = math.log %236 : vector<1x24x1xf32>
    %238 = arith.addf %231, %237 : vector<1x24x1xf32>
    %239 = arith.subf %48, %238 : vector<1x24x1xf32>
    %240 = vector.broadcast %239 : vector<1x24x1xf32> to vector<1x24x128xf32>
    %241 = arith.addf %27, %240 : vector<1x24x128xf32>
    %cst_57 = arith.constant dense<0xFF800000> : vector<1x128xf32>
    %242 = vector.multi_reduction <maximumf>, %241, %cst_57 [1] : vector<1x24x128xf32> to vector<1x128xf32>
    %243 = vector.shape_cast %242 : vector<1x128xf32> to vector<1x1x128xf32>
    %244 = vector.broadcast %243 : vector<1x1x128xf32> to vector<1x24x128xf32>
    %245 = arith.subf %241, %244 : vector<1x24x128xf32>
    %246 = math.exp %245 : vector<1x24x128xf32>
    %cst_58 = arith.constant dense<0.000000e+00> : vector<1x128xf32>
    %247 = vector.multi_reduction <add>, %246, %cst_58 [1] : vector<1x24x128xf32> to vector<1x128xf32>
    %248 = vector.shape_cast %247 : vector<1x128xf32> to vector<1x1x128xf32>
    %249 = math.log %248 : vector<1x1x128xf32>
    %250 = arith.addf %243, %249 : vector<1x1x128xf32>
    %251 = arith.subf %57, %250 : vector<1x1x128xf32>
    %c8_i32 = arith.constant 8 : i32
    %252 = vector.broadcast %251 : vector<1x1x128xf32> to vector<1x24x128xf32>
    %253 = arith.addf %27, %252 : vector<1x24x128xf32>
    %cst_59 = arith.constant dense<0xFF800000> : vector<1x24xf32>
    %254 = vector.multi_reduction <maximumf>, %253, %cst_59 [2] : vector<1x24x128xf32> to vector<1x24xf32>
    %255 = vector.shape_cast %254 : vector<1x24xf32> to vector<1x24x1xf32>
    %256 = vector.broadcast %255 : vector<1x24x1xf32> to vector<1x24x128xf32>
    %257 = arith.subf %253, %256 : vector<1x24x128xf32>
    %258 = math.exp %257 : vector<1x24x128xf32>
    %cst_60 = arith.constant dense<0.000000e+00> : vector<1x24xf32>
    %259 = vector.multi_reduction <add>, %258, %cst_60 [2] : vector<1x24x128xf32> to vector<1x24xf32>
    %260 = vector.shape_cast %259 : vector<1x24xf32> to vector<1x24x1xf32>
    %261 = math.log %260 : vector<1x24x1xf32>
    %262 = arith.addf %255, %261 : vector<1x24x1xf32>
    %263 = arith.subf %48, %262 : vector<1x24x1xf32>
    %264 = vector.broadcast %263 : vector<1x24x1xf32> to vector<1x24x128xf32>
    %265 = arith.addf %27, %264 : vector<1x24x128xf32>
    %cst_61 = arith.constant dense<0xFF800000> : vector<1x128xf32>
    %266 = vector.multi_reduction <maximumf>, %265, %cst_61 [1] : vector<1x24x128xf32> to vector<1x128xf32>
    %267 = vector.shape_cast %266 : vector<1x128xf32> to vector<1x1x128xf32>
    %268 = vector.broadcast %267 : vector<1x1x128xf32> to vector<1x24x128xf32>
    %269 = arith.subf %265, %268 : vector<1x24x128xf32>
    %270 = math.exp %269 : vector<1x24x128xf32>
    %cst_62 = arith.constant dense<0.000000e+00> : vector<1x128xf32>
    %271 = vector.multi_reduction <add>, %270, %cst_62 [1] : vector<1x24x128xf32> to vector<1x128xf32>
    %272 = vector.shape_cast %271 : vector<1x128xf32> to vector<1x1x128xf32>
    %273 = math.log %272 : vector<1x1x128xf32>
    %274 = arith.addf %267, %273 : vector<1x1x128xf32>
    %275 = arith.subf %57, %274 : vector<1x1x128xf32>
    %c9_i32 = arith.constant 9 : i32
    %276 = vector.broadcast %275 : vector<1x1x128xf32> to vector<1x24x128xf32>
    %277 = arith.addf %27, %276 : vector<1x24x128xf32>
    %cst_63 = arith.constant dense<0xFF800000> : vector<1x24xf32>
    %278 = vector.multi_reduction <maximumf>, %277, %cst_63 [2] : vector<1x24x128xf32> to vector<1x24xf32>
    %279 = vector.shape_cast %278 : vector<1x24xf32> to vector<1x24x1xf32>
    %280 = vector.broadcast %279 : vector<1x24x1xf32> to vector<1x24x128xf32>
    %281 = arith.subf %277, %280 : vector<1x24x128xf32>
    %282 = math.exp %281 : vector<1x24x128xf32>
    %cst_64 = arith.constant dense<0.000000e+00> : vector<1x24xf32>
    %283 = vector.multi_reduction <add>, %282, %cst_64 [2] : vector<1x24x128xf32> to vector<1x24xf32>
    %284 = vector.shape_cast %283 : vector<1x24xf32> to vector<1x24x1xf32>
    %285 = math.log %284 : vector<1x24x1xf32>
    %286 = arith.addf %279, %285 : vector<1x24x1xf32>
    %287 = arith.subf %48, %286 : vector<1x24x1xf32>
    %288 = vector.broadcast %287 : vector<1x24x1xf32> to vector<1x24x128xf32>
    %289 = arith.addf %27, %288 : vector<1x24x128xf32>
    %cst_65 = arith.constant dense<0xFF800000> : vector<1x128xf32>
    %290 = vector.multi_reduction <maximumf>, %289, %cst_65 [1] : vector<1x24x128xf32> to vector<1x128xf32>
    %291 = vector.shape_cast %290 : vector<1x128xf32> to vector<1x1x128xf32>
    %292 = vector.broadcast %291 : vector<1x1x128xf32> to vector<1x24x128xf32>
    %293 = arith.subf %289, %292 : vector<1x24x128xf32>
    %294 = math.exp %293 : vector<1x24x128xf32>
    %cst_66 = arith.constant dense<0.000000e+00> : vector<1x128xf32>
    %295 = vector.multi_reduction <add>, %294, %cst_66 [1] : vector<1x24x128xf32> to vector<1x128xf32>
    %296 = vector.shape_cast %295 : vector<1x128xf32> to vector<1x1x128xf32>
    %297 = math.log %296 : vector<1x1x128xf32>
    %298 = arith.addf %291, %297 : vector<1x1x128xf32>
    %299 = arith.subf %57, %298 : vector<1x1x128xf32>
    %300 = vector.broadcast %287 : vector<1x24x1xf32> to vector<1x24x128xf32>
    %301 = arith.addf %27, %300 : vector<1x24x128xf32>
    %302 = vector.broadcast %299 : vector<1x1x128xf32> to vector<1x24x128xf32>
    %303 = arith.addf %301, %302 : vector<1x24x128xf32>
    %304 = vector.broadcast %39 : vector<1x1x1xf32> to vector<1x24x128xf32>
    %305 = arith.subf %303, %304 : vector<1x24x128xf32>
    %c0_67 = arith.constant 0 : index
    %c0_68 = arith.constant 0 : index
    %c0_69 = arith.constant 0 : index
    %306 = vector.load %arg6[%c0_67, %c0_68, %c0_69] : memref<1x24x128xf32, #tpu.memory_space<vmem>>, vector<1x24x128xf32>
    tpu.vector_store %arg6[%c0_67, %c0_68, %c0_69], %305 {strides = array<i32>} : memref<1x24x128xf32, #tpu.memory_space<vmem>>, vector<1x24x128xf32>,
    return
  }
  func.func @transform_0(%arg0: i32) -> (i32, i32) {
    %c0_i32 = arith.constant 0 : i32
    %c0_i32_0 = arith.constant 0 : i32
    %c0_i32_1 = arith.constant 0 : i32
    return %c0_i32, %c0_i32_0 : i32, i32
  }
  func.func @transform_1(%arg0: i32) -> (i32, i32, i32) {
    %c0_i32 = arith.constant 0 : i32
    %c0_i32_0 = arith.constant 0 : i32
    %c0_i32_1 = arith.constant 0 : i32
    return %arg0, %c0_i32, %c0_i32_0 : i32, i32, i32
  }
  func.func @transform_2(%arg0: i32) -> (i32, i32, i32) {
    %c0_i32 = arith.constant 0 : i32
    %c0_i32_0 = arith.constant 0 : i32
    %c0_i32_1 = arith.constant 0 : i32
    return %arg0, %c0_i32, %c0_i32_0 : i32, i32, i32
  }
  func.func @transform_3(%arg0: i32) -> (i32, i32, i32) {
    %c0_i32 = arith.constant 0 : i32
    %c0_i32_0 = arith.constant 0 : i32
    %c0_i32_1 = arith.constant 0 : i32
    return %arg0, %c0_i32, %c0_i32_0 : i32, i32, i32
  }
  func.func @transform_4(%arg0: i32) -> (i32, i32, i32) {
    %c0_i32 = arith.constant 0 : i32
    %c0_i32_0 = arith.constant 0 : i32
    %c0_i32_1 = arith.constant 0 : i32
    return %arg0, %c0_i32, %c0_i32_0 : i32, i32, i32
  }
  func.func @transform_5(%arg0: i32) -> (i32, i32, i32) {
    %c0_i32 = arith.constant 0 : i32
    %c0_i32_0 = arith.constant 0 : i32
    %c0_i32_1 = arith.constant 0 : i32
    return %arg0, %c0_i32, %c0_i32_0 : i32, i32, i32
  }
}

</mosaic_0001>

<llo_original>
// kernel: tpu_custom_call.1
$region0: #{tpu_custom_call.1}
  #allocation0 [shape = 'u32[]', space=smem, size = 0x4, offset = 0x4, fixed_abs, tag = 'smem constant byte address 0x4 - core index']
  #allocation1 [shape = 'u32[144,128]{1,0:T(1,128)}', space=vmem, size = 0x12000, scoped, tag = 'internal scratch']
  #allocation2 [shape = 'f32[1,1]{1,0:T(1,128)S(6)}', space=smem, size = 0x200, scoped, tag = 'scoped memory for tpu_custom_call.1']
  %s0 = inlined_call_operand.<no memory space> [shape: f32[1,1], index: 0, kind: input, shape index: {}]
  %s1 = inlined_call_operand.vmem [shape: bf16[1,24,32], index: 1, kind: input, shape index: {}]
  %s2 = inlined_call_operand.vmem [shape: bf16[1,128,32], index: 2, kind: input, shape index: {}]
  %s3 = inlined_call_operand.vmem [shape: f32[1,24,1], index: 3, kind: input, shape index: {}]
  %s4 = inlined_call_operand.vmem [shape: f32[1,1,128], index: 4, kind: input, shape index: {}]
  %s5 = inlined_call_operand.hbm [shape: f32[1,24,128], index: 5, kind: output, shape index: {}]
  %s6 = sld [smem:[#allocation0]]
  $region30: #{tpu_custom_call.1} parent=0
    _
  %s8 = ssub.s32 1, %s6
  %s9 = scalar_select 0, %s8, %s6
  %10 = sst [smem:[#allocation2]] %s0
  $region1: #{tpu_custom_call.1} parent=0
    #allocation3 [shape = 'u8[12288]{0}', space=vmem, size = 0x3000, scoped, tag = 'output window, operand 0, single buffered']
    #allocation4 [shape = 's32[1]{0}', space=sflag, size = 0x4, scoped, tag = 'scoped memory for tpu_custom_call.1']
    %11 = vsyncpa [#allocation4], 0
    // Predicated region
    $region2: #{tpu_custom_call.1} parent=1 // pred_check
      _
    $region3: #{tpu_custom_call.1} parent=1 // pred_check_branch
      %13 = sbr.rel (0) target = $region5
    $region4: #{tpu_custom_call.1} parent=1 // pred_region
      _
    $region5: #{tpu_custom_call.1} parent=1 // pred_fallthru
      _
    // Predicated region
    $region6: #{tpu_custom_call.1} parent=1 // pred_check
      _
    $region7: #{tpu_custom_call.1} parent=1 // pred_check_branch
      %15 = sbr.rel (0) target = $region9
    $region8: #{tpu_custom_call.1} parent=1 // pred_region
      _
    $region9: #{tpu_custom_call.1} parent=1 // pred_fallthru
      _
    // Predicated region
    $region10: #{tpu_custom_call.1} parent=1 // pred_check
      _
    $region11: #{tpu_custom_call.1} parent=1 // pred_check_branch
      %17 = sbr.rel (0) target = $region13
    $region12: #{tpu_custom_call.1} parent=1 // pred_region
      _
    $region13: #{tpu_custom_call.1} parent=1 // pred_fallthru
      _
    // Predicated region
    $region14: #{tpu_custom_call.1} parent=1 // pred_check
      _
    $region15: #{tpu_custom_call.1} parent=1 // pred_check_branch
      %19 = sbr.rel (0) target = $region17
    $region16: #{tpu_custom_call.1} parent=1 // pred_region
      _
    $region17: #{tpu_custom_call.1} parent=1 // pred_fallthru
      _
    // Predicated region
    $region18: #{tpu_custom_call.1} parent=1 // pred_check
      _
    $region19: #{tpu_custom_call.1} parent=1 // pred_check_branch
      %21 = sbr.rel (0) target = $region21
    $region20: #{tpu_custom_call.1} parent=1 // pred_region
      _
    $region21: #{tpu_custom_call.1} parent=1 // pred_fallthru
      _
    %v23 = vld [vmem:[%s1] sm:$0xf]
    %v24 = vld [vmem:[%s1 + $0x4] sm:$0xf]
    %v25 = vld [vmem:[%s1 + $0x8] sm:$0xf]
    %v26 = vld [vmem:[%s2] sm:$0xf]
    %v27 = vld [vmem:[%s2 + $0x4] sm:$0xf]
    %v28 = vld [vmem:[%s2 + $0x8] sm:$0xf]
    %v29 = vld [vmem:[%s2 + $0xc] sm:$0xf]
    %v30 = vld [vmem:[%s2 + $0x10] sm:$0xf]
    %v31 = vld [vmem:[%s2 + $0x14] sm:$0xf]
    %v32 = vld [vmem:[%s2 + $0x18] sm:$0xf]
    %v33 = vld [vmem:[%s2 + $0x1c] sm:$0xf]
    %v34 = vld [vmem:[%s2 + $0x20] sm:$0xf]
    %v35 = vld [vmem:[%s2 + $0x24] sm:$0xf]
    %v36 = vld [vmem:[%s2 + $0x28] sm:$0xf]
    %v37 = vld [vmem:[%s2 + $0x2c] sm:$0xf]
    %v38 = vld [vmem:[%s2 + $0x30] sm:$0xf]
    %v39 = vld [vmem:[%s2 + $0x34] sm:$0xf]
    %v40 = vld [vmem:[%s2 + $0x38] sm:$0xf]
    %v41 = vld [vmem:[%s2 + $0x3c] sm:$0xf]
    %v42 = vld [vmem:[%s3] sm:$0xff]
    %v43 = vld [vmem:[%s3 + $0x8] sm:$0xff]
    %v44 = vld [vmem:[%s3 + $0x10] sm:$0xff]
    %v45 = vld [vmem:[%s4] sm:$0x1]
    %s46 = sld [smem:[#allocation2]]
    %v50 = vunpack.c.l.b16 %v23
    %v51 = vunpack.c.l.b16 %v24
    %v52 = vunpack.c.l.b16 %v25
    %v53 = vpack.c.b16 %v51, %v50
    %v54 = vpack.c.b16 %v52, %v52
    %v71 = vunpack.c.l.b16 %v26
    %v72 = vunpack.c.l.b16 %v27
    %v73 = vunpack.c.l.b16 %v28
    %v74 = vunpack.c.l.b16 %v29
    %v75 = vunpack.c.l.b16 %v30
    %v76 = vunpack.c.l.b16 %v31
    %v77 = vunpack.c.l.b16 %v32
    %v78 = vunpack.c.l.b16 %v33
    %v79 = vunpack.c.l.b16 %v34
    %v80 = vunpack.c.l.b16 %v35
    %v81 = vunpack.c.l.b16 %v36
    %v82 = vunpack.c.l.b16 %v37
    %v83 = vunpack.c.l.b16 %v38
    %v84 = vunpack.c.l.b16 %v39
    %v85 = vunpack.c.l.b16 %v40
    %v86 = vunpack.c.l.b16 %v41
    %v87 = vpack.c.b16 %v72, %v71
    %v88 = vpack.c.b16 %v74, %v73
    %v89 = vpack.c.b16 %v76, %v75
    %v90 = vpack.c.b16 %v78, %v77
    %v91 = vpack.c.b16 %v80, %v79
    %v92 = vpack.c.b16 %v82, %v81
    %v93 = vpack.c.b16 %v84, %v83
    %v94 = vpack.c.b16 %v86, %v85
    %vm95 = vcmask 261120
    %v97 = vsel %vm95, %v53, 0
    %v100 = vsel %vm95, %v54, 0
    %v103 = vsel %vm95, %v87, 0
    %v106 = vsel %vm95, %v88, 0
    %v109 = vsel %vm95, %v89, 0
    %v112 = vsel %vm95, %v90, 0
    %v115 = vsel %vm95, %v91, 0
    %v118 = vsel %vm95, %v92, 0
    %v121 = vsel %vm95, %v93, 0
    %v124 = vsel %vm95, %v94, 0
    %126 = vmatprep.subr.bf16.mxu0 0
    %127 = vmatpush1.bf16.xpose.msra.mxu0 %v103
    %128 = vmatprep.subr.bf16.mxu0 0
    %129 = vmatpush1.bf16.xpose.msra.mxu0 %v106
    %130 = vmatprep.subr.bf16.mxu0 0
    %131 = vmatpush1.bf16.xpose.msra.mxu0 %v109
    %132 = vmatprep.subr.bf16.mxu0 0
    %133 = vmatpush1.bf16.xpose.msra.mxu0 %v112
    %134 = vmatprep.subr.bf16.mxu0 0
    %135 = vmatpush1.bf16.xpose.msra.mxu0 %v115
    %136 = vmatprep.subr.bf16.mxu0 0
    %137 = vmatpush1.bf16.xpose.msra.mxu0 %v118
    %138 = vmatprep.subr.bf16.mxu0 0
    %139 = vmatpush1.bf16.xpose.msra.mxu0 %v121
    %140 = vmatprep.subr.bf16.mxu0 0
    %141 = vmatpush1.bf16.xpose.msra.mxu0 %v124
    %142 = vmatprep.subr.bf16.mxu0 0
    %143 = vmatpush1.bf16.xpose.msra.mxu0 0
    %144 = vmatprep.subr.bf16.mxu0 0
    %145 = vmatpush1.bf16.xpose.msra.mxu0 0
    %146 = vmatprep.subr.bf16.mxu0 0
    %147 = vmatpush1.bf16.xpose.msra.mxu0 0
    %148 = vmatprep.subr.bf16.mxu0 0
    %149 = vmatpush1.bf16.xpose.msra.mxu0 0
    %150 = vmatprep.subr.bf16.mxu0 0
    %151 = vmatpush1.bf16.xpose.msra.mxu0 0
    %152 = vmatprep.subr.bf16.mxu0 0
    %153 = vmatpush1.bf16.xpose.msra.mxu0 0
    %154 = vmatprep.subr.bf16.mxu0 0
    %155 = vmatpush1.bf16.xpose.msra.mxu0 0
    %156 = vmatprep.subr.bf16.mxu0 0
    %157 = vmatpush1.bf16.xpose.msra.mxu0 0
    %158 = vmatprep.mubr.bf16.mxu0 0
    %159 = vmatmul.mubr.bf16.gmra.mrb[0].mxu0 %v97
    %v160 = vpop.f32.mrb[0].mxu0
    %v161 = vadd.f32 0.0, %v160
    %v162 = vpop.f32.mrb[0].mxu0
    %v163 = vpop.f32.mrb[0].mxu0
    %v164 = vadd.f32 0.0, %v163
    %v165 = vpop.f32.mrb[0].mxu0
    %166 = vmatprep.mubr.bf16.mxu0 0
    %167 = vmatmul.mubr.bf16.gmra.mrb[0].mxu0 %v100
    %v168 = vpop.f32.mrb[0].mxu0
    %v169 = vadd.f32 0.0, %v168
    %v170 = vpop.f32.mrb[0].mxu0
    %v171 = vpop.f32.mrb[0].mxu0
    %v172 = vpop.f32.mrb[0].mxu0
    %173 = vdwg.mxu0
    %v174 = vmul.f32 %v161, 0.17677669
    %v175 = vmul.f32 %v164, 0.17677669
    %v176 = vmul.f32 %v169, 0.17677669
    %v177 = vlaneseq
    %v178 = vshrl.u32 %v177, 7
    %v179 = vadd.s32 %v178, 8
    %v180 = vadd.s32 %v178, 16
    %v181 = vlaneseq
    %v182 = vand.u32 %v181, 127
    %vm183 = vcmp.eq.s32.totalorder %v178, 16
    %vm184 = vcmp.eq.s32.totalorder %v179, 16
    %vm185 = vcmp.eq.s32.totalorder %v180, 16
    %vm186 = vcmp.eq.s32.totalorder %v182, 16
    %vm187 = vcmp.lt.f32.partialorder %v42, 0.5
    %vm188 = vcmp.lt.f32.partialorder %v43, 0.5
    %vm189 = vcmp.lt.f32.partialorder %v44, 0.5
    %vm190 = vcmp.lt.f32.partialorder %v45, 0.5
    %v191 = vsel %vm183, 1, 0
    %v192 = vsel %vm184, 1, 0
    %v193 = vsel %vm185, 1, 0
    %vm194 = vcmp.eq.s32.totalorder %v191, 1
    %vm195 = vcmp.eq.s32.totalorder %v192, 1
    %vm196 = vcmp.eq.s32.totalorder %v193, 1
    %v197 = vsel %vm186, 1, 0
    %vm198 = vcmp.eq.s32.totalorder %v197, 1
    %vm199 = vmor %vm194, %vm198
    %vm200 = vmor %vm195, %vm198
    %vm201 = vmor %vm196, %vm198
    %v202 = vstv %s46
    %v203 = vsel %vm199, %v202, %v174
    %v204 = vsel %vm200, %v202, %v175
    %v205 = vsel %vm201, %v202, %v176
    %v206 = vsel %vm187, 1, 0
    %v207 = vsel %vm188, 1, 0
    %v208 = vsel %vm189, 1, 0
    %209 = vset.pattern.permute.xlu0 0
    %210 = vperm.xlu0 %209, %v206
    %v211 = vpop.permute.xlu0 %210
    %212 = vset.pattern.permute.xlu0 0
    %213 = vperm.xlu0 %212, %v207
    %v214 = vpop.permute.xlu0 %213
    %215 = vset.pattern.permute.xlu0 0
    %216 = vperm.xlu0 %215, %v208
    %v217 = vpop.permute.xlu0 %216
    %vm218 = vcmp.eq.s32.totalorder %v211, 1
    %vm219 = vcmp.eq.s32.totalorder %v214, 1
    %vm220 = vcmp.eq.s32.totalorder %v217, 1
    %v221 = vsel %vm190, 1, 0
    %v222 = vlaneseq
    %v223 = vshrl.u32 %v222, 7
    %v224 = vsub.s32 0, %v223
    %v225 = vrot.slane %v221, %v224
    %vm226 = vcmp.eq.s32.totalorder %v225, 1
    %vm227 = vmor %vm218, %vm226
    %vm228 = vmor %vm219, %vm226
    %vm229 = vmor %vm220, %vm226
    %v230 = vsel %vm227, -1e+12, %v203
    %v231 = vsel %vm228, -1e+12, %v204
    %v232 = vsel %vm229, -1e+12, %v205
    %vm233 = vcmask 7168
    %v234 = vsel %vm233, %v42, 0.0
    %v235 = vsel %vm233, %v43, 0.0
    %v236 = vadd.f32 %v234, %v235
    %v237 = vsel %vm233, %v44, 0.0
    %v238 = vadd.f32 %v236, %v237
    %v239 = vrot.slane %v238, 4
    %v240 = vadd.f32 %v238, %v239
    %v241 = vrot.slane %v240, 2
    %v242 = vadd.f32 %v240, %v241
    %v243 = vrot.slane %v242, 1
    %v244 = vadd.f32 %v242, %v243
    %v245 = vsub.f32 %v244, 1.0
    %vm246 = vcmask 1040384
    %v247 = vsel %vm246, %v45, 0.0
    %248 = vadd.xlane.f32.xlu0 %v247
    %v249 = vpop.xlane.xlu0 %248
    %v250 = vsub.f32 %v249, 1.0
    %v251 = vadd.f32 %v245, %v250
    %v252 = vlog2.pop %v251
    %v253 = vmul.f32 %v252, 0.6931472
    %v254 = vsub.f32 0.0, %v253
    %v255 = vlog2.pop %v250
    %v256 = vmul.f32 %v255, 0.6931472
    %v257 = vadd.f32 %v256, %v254
    %v258 = vlaneseq
    %v259 = vshrl.u32 %v258, 7
    %v260 = vsub.s32 0, %v259
    %v261 = vrot.slane %v257, %v260
    %v262 = vlaneseq
    %v263 = vshrl.u32 %v262, 7
    %v264 = vsub.s32 0, %v263
    %v265 = vrot.slane %v254, %v264
    %v266 = vsel %vm183, %v261, %v265
    %v267 = vsel %vm184, %v261, %v265
    %v268 = vsel %vm185, %v261, %v265
    %v269 = vsel %vm187, -1e+12, %v266
    %v270 = vsel %vm188, -1e+12, %v267
    %v271 = vsel %vm189, -1e+12, %v268
    %v272 = vlog2.pop %v245
    %v273 = vmul.f32 %v272, 0.6931472
    %v274 = vadd.f32 %v273, %v254
    %276 = vset.pattern.permute.xlu0 0
    %277 = vperm.xlu0 %276, %v274
    %v278 = vpop.permute.xlu0 %277
    %281 = vset.pattern.permute.xlu0 0
    %282 = vperm.xlu0 %281, %v254
    %v283 = vpop.permute.xlu0 %282
    %v285 = vsel %vm186, %v278, %v283
    %v286 = vsel %vm190, -1e+12, %v285
    %v287 = vadd.f32 %v230, 0.0
    %v288 = vadd.f32 %v231, 0.0
    %v289 = vadd.f32 %v232, 0.0
    %290 = vmax.xlane.f32.xlu0 %v287
    %v291 = vpop.xlane.xlu0 %290
    %292 = vmax.xlane.f32.xlu0 %v288
    %v293 = vpop.xlane.xlu0 %292
    %294 = vmax.xlane.f32.xlu0 %v289
    %v295 = vpop.xlane.xlu0 %294
    %v296 = vsub.f32 %v287, %v291
    %v297 = vsub.f32 %v288, %v293
    %v298 = vsub.f32 %v289, %v295
    %v299 = vmul.f32 %v296, 1.442695
    %v300 = vpow.pop %v299
    %v301 = vmul.f32 %v297, 1.442695
    %v302 = vpow.pop %v301
    %v303 = vmul.f32 %v298, 1.442695
    %v304 = vpow.pop %v303
    %305 = vadd.xlane.f32.xlu0 %v300
    %v306 = vpop.xlane.xlu0 %305
    %307 = vadd.xlane.f32.xlu0 %v302
    %v308 = vpop.xlane.xlu0 %307
    %309 = vadd.xlane.f32.xlu0 %v304
    %v310 = vpop.xlane.xlu0 %309
    %v311 = vlog2.pop %v306
    %v312 = vmul.f32 %v311, 0.6931472
    %v313 = vlog2.pop %v308
    %v314 = vmul.f32 %v313, 0.6931472
    %v315 = vlog2.pop %v310
    %v316 = vmul.f32 %v315, 0.6931472
    %v317 = vadd.f32 %v291, %v312
    %v318 = vadd.f32 %v293, %v314
    %v319 = vadd.f32 %v295, %v316
    %v320 = vsub.f32 %v269, %v317
    %v321 = vsub.f32 %v270, %v318
    %v322 = vsub.f32 %v271, %v319
    %324 = vset.pattern.permute.xlu0 0
    %325 = vperm.xlu0 %324, %v320
    %v326 = vpop.permute.xlu0 %325
    %329 = vset.pattern.permute.xlu0 0
    %330 = vperm.xlu0 %329, %v321
    %v331 = vpop.permute.xlu0 %330
    %334 = vset.pattern.permute.xlu0 0
    %335 = vperm.xlu0 %334, %v322
    %v336 = vpop.permute.xlu0 %335
    %v338 = vadd.f32 %v230, %v326
    %v339 = vadd.f32 %v231, %v331
    %v340 = vadd.f32 %v232, %v336
    %v341 = vmax.f32 %v338, %v339
    %v342 = vmax.f32 %v341, %v340
    %v343 = vrot.slane %v342, 4
    %v344 = vmax.f32 %v342, %v343
    %v345 = vrot.slane %v344, 2
    %v346 = vmax.f32 %v344, %v345
    %v347 = vrot.slane %v346, 1
    %v348 = vmax.f32 %v346, %v347
    %v349 = vsub.f32 %v338, %v348
    %v350 = vsub.f32 %v339, %v348
    %v351 = vsub.f32 %v340, %v348
    %v352 = vmul.f32 %v349, 1.442695
    %v353 = vpow.pop %v352
    %v354 = vmul.f32 %v350, 1.442695
    %v355 = vpow.pop %v354
    %v356 = vmul.f32 %v351, 1.442695
    %v357 = vpow.pop %v356
    %v358 = vadd.f32 %v353, %v355
    %v359 = vadd.f32 %v358, %v357
    %v360 = vrot.slane %v359, 4
    %v361 = vadd.f32 %v359, %v360
    %v362 = vrot.slane %v361, 2
    %v363 = vadd.f32 %v361, %v362
    %v364 = vrot.slane %v363, 1
    %v365 = vadd.f32 %v363, %v364
    %v366 = vlog2.pop %v365
    %v367 = vmul.f32 %v366, 0.6931472
    %v368 = vadd.f32 %v348, %v367
    %v369 = vsub.f32 %v286, %v368
    %v371 = vlaneseq
    %v372 = vshrl.u32 %v371, 7
    %v373 = vsub.s32 0, %v372
    %v374 = vrot.slane %v369, %v373
    %v376 = vadd.f32 %v230, %v374
    %v377 = vadd.f32 %v231, %v374
    %v378 = vadd.f32 %v232, %v374
    %379 = vmax.xlane.f32.xlu0 %v376
    %v380 = vpop.xlane.xlu0 %379
    %381 = vmax.xlane.f32.xlu0 %v377
    %v382 = vpop.xlane.xlu0 %381
    %383 = vmax.xlane.f32.xlu0 %v378
    %v384 = vpop.xlane.xlu0 %383
    %v385 = vsub.f32 %v376, %v380
    %v386 = vsub.f32 %v377, %v382
    %v387 = vsub.f32 %v378, %v384
    %v388 = vmul.f32 %v385, 1.442695
    %v389 = vpow.pop %v388
    %v390 = vmul.f32 %v386, 1.442695
    %v391 = vpow.pop %v390
    %v392 = vmul.f32 %v387, 1.442695
    %v393 = vpow.pop %v392
    %394 = vadd.xlane.f32.xlu0 %v389
    %v395 = vpop.xlane.xlu0 %394
    %396 = vadd.xlane.f32.xlu0 %v391
    %v397 = vpop.xlane.xlu0 %396
    %398 = vadd.xlane.f32.xlu0 %v393
    %v399 = vpop.xlane.xlu0 %398
    %v400 = vlog2.pop %v395
    %v401 = vmul.f32 %v400, 0.6931472
    %v402 = vlog2.pop %v397
    %v403 = vmul.f32 %v402, 0.6931472
    %v404 = vlog2.pop %v399
    %v405 = vmul.f32 %v404, 0.6931472
    %v406 = vadd.f32 %v380, %v401
    %v407 = vadd.f32 %v382, %v403
    %v408 = vadd.f32 %v384, %v405
    %v409 = vsub.f32 %v269, %v406
    %v410 = vsub.f32 %v270, %v407
    %v411 = vsub.f32 %v271, %v408
    %413 = vset.pattern.permute.xlu0 0
    %414 = vperm.xlu0 %413, %v409
    %v415 = vpop.permute.xlu0 %414
    %418 = vset.pattern.permute.xlu0 0
    %419 = vperm.xlu0 %418, %v410
    %v420 = vpop.permute.xlu0 %419
    %423 = vset.pattern.permute.xlu0 0
    %424 = vperm.xlu0 %423, %v411
    %v425 = vpop.permute.xlu0 %424
    %v427 = vadd.f32 %v230, %v415
    %v428 = vadd.f32 %v231, %v420
    %v429 = vadd.f32 %v232, %v425
    %v430 = vmax.f32 %v427, %v428
    %v431 = vmax.f32 %v430, %v429
    %v432 = vrot.slane %v431, 4
    %v433 = vmax.f32 %v431, %v432
    %v434 = vrot.slane %v433, 2
    %v435 = vmax.f32 %v433, %v434
    %v436 = vrot.slane %v435, 1
    %v437 = vmax.f32 %v435, %v436
    %v438 = vsub.f32 %v427, %v437
    %v439 = vsub.f32 %v428, %v437
    %v440 = vsub.f32 %v429, %v437
    %v441 = vmul.f32 %v438, 1.442695
    %v442 = vpow.pop %v441
    %v443 = vmul.f32 %v439, 1.442695
    %v444 = vpow.pop %v443
    %v445 = vmul.f32 %v440, 1.442695
    %v446 = vpow.pop %v445
    %v447 = vadd.f32 %v442, %v444
    %v448 = vadd.f32 %v447, %v446
    %v449 = vrot.slane %v448, 4
    %v450 = vadd.f32 %v448, %v449
    %v451 = vrot.slane %v450, 2
    %v452 = vadd.f32 %v450, %v451
    %v453 = vrot.slane %v452, 1
    %v454 = vadd.f32 %v452, %v453
    %v455 = vlog2.pop %v454
    %v456 = vmul.f32 %v455, 0.6931472
    %v457 = vadd.f32 %v437, %v456
    %v458 = vsub.f32 %v286, %v457
    %v460 = vlaneseq
    %v461 = vshrl.u32 %v460, 7
    %v462 = vsub.s32 0, %v461
    %v463 = vrot.slane %v458, %v462
    %v465 = vadd.f32 %v230, %v463
    %v466 = vadd.f32 %v231, %v463
    %v467 = vadd.f32 %v232, %v463
    %468 = vmax.xlane.f32.xlu0 %v465
    %v469 = vpop.xlane.xlu0 %468
    %470 = vmax.xlane.f32.xlu0 %v466
    %v471 = vpop.xlane.xlu0 %470
    %472 = vmax.xlane.f32.xlu0 %v467
    %v473 = vpop.xlane.xlu0 %472
    %v474 = vsub.f32 %v465, %v469
    %v475 = vsub.f32 %v466, %v471
    %v476 = vsub.f32 %v467, %v473
    %v477 = vmul.f32 %v474, 1.442695
    %v478 = vpow.pop %v477
    %v479 = vmul.f32 %v475, 1.442695
    %v480 = vpow.pop %v479
    %v481 = vmul.f32 %v476, 1.442695
    %v482 = vpow.pop %v481
    %483 = vadd.xlane.f32.xlu0 %v478
    %v484 = vpop.xlane.xlu0 %483
    %485 = vadd.xlane.f32.xlu0 %v480
    %v486 = vpop.xlane.xlu0 %485
    %487 = vadd.xlane.f32.xlu0 %v482
    %v488 = vpop.xlane.xlu0 %487
    %v489 = vlog2.pop %v484
    %v490 = vmul.f32 %v489, 0.6931472
    %v491 = vlog2.pop %v486
    %v492 = vmul.f32 %v491, 0.6931472
    %v493 = vlog2.pop %v488
    %v494 = vmul.f32 %v493, 0.6931472
    %v495 = vadd.f32 %v469, %v490
    %v496 = vadd.f32 %v471, %v492
    %v497 = vadd.f32 %v473, %v494
    %v498 = vsub.f32 %v269, %v495
    %v499 = vsub.f32 %v270, %v496
    %v500 = vsub.f32 %v271, %v497
    %502 = vset.pattern.permute.xlu0 0
    %503 = vperm.xlu0 %502, %v498
    %v504 = vpop.permute.xlu0 %503
    %507 = vset.pattern.permute.xlu0 0
    %508 = vperm.xlu0 %507, %v499
    %v509 = vpop.permute.xlu0 %508
    %512 = vset.pattern.permute.xlu0 0
    %513 = vperm.xlu0 %512, %v500
    %v514 = vpop.permute.xlu0 %513
    %v516 = vadd.f32 %v230, %v504
    %v517 = vadd.f32 %v231, %v509
    %v518 = vadd.f32 %v232, %v514
    %v519 = vmax.f32 %v516, %v517
    %v520 = vmax.f32 %v519, %v518
    %v521 = vrot.slane %v520, 4
    %v522 = vmax.f32 %v520, %v521
    %v523 = vrot.slane %v522, 2
    %v524 = vmax.f32 %v522, %v523
    %v525 = vrot.slane %v524, 1
    %v526 = vmax.f32 %v524, %v525
    %v527 = vsub.f32 %v516, %v526
    %v528 = vsub.f32 %v517, %v526
    %v529 = vsub.f32 %v518, %v526
    %v530 = vmul.f32 %v527, 1.442695
    %v531 = vpow.pop %v530
    %v532 = vmul.f32 %v528, 1.442695
    %v533 = vpow.pop %v532
    %v534 = vmul.f32 %v529, 1.442695
    %v535 = vpow.pop %v534
    %v536 = vadd.f32 %v531, %v533
    %v537 = vadd.f32 %v536, %v535
    %v538 = vrot.slane %v537, 4
    %v539 = vadd.f32 %v537, %v538
    %v540 = vrot.slane %v539, 2
    %v541 = vadd.f32 %v539, %v540
    %v542 = vrot.slane %v541, 1
    %v543 = vadd.f32 %v541, %v542
    %v544 = vlog2.pop %v543
    %v545 = vmul.f32 %v544, 0.6931472
    %v546 = vadd.f32 %v526, %v545
    %v547 = vsub.f32 %v286, %v546
    %v549 = vlaneseq
    %v550 = vshrl.u32 %v549, 7
    %v551 = vsub.s32 0, %v550
    %v552 = vrot.slane %v547, %v551
    %v554 = vadd.f32 %v230, %v552
    %v555 = vadd.f32 %v231, %v552
    %v556 = vadd.f32 %v232, %v552
    %557 = vmax.xlane.f32.xlu0 %v554
    %v558 = vpop.xlane.xlu0 %557
    %559 = vmax.xlane.f32.xlu0 %v555
    %v560 = vpop.xlane.xlu0 %559
    %561 = vmax.xlane.f32.xlu0 %v556
    %v562 = vpop.xlane.xlu0 %561
    %v563 = vsub.f32 %v554, %v558
    %v564 = vsub.f32 %v555, %v560
    %v565 = vsub.f32 %v556, %v562
    %v566 = vmul.f32 %v563, 1.442695
    %v567 = vpow.pop %v566
    %v568 = vmul.f32 %v564, 1.442695
    %v569 = vpow.pop %v568
    %v570 = vmul.f32 %v565, 1.442695
    %v571 = vpow.pop %v570
    %572 = vadd.xlane.f32.xlu0 %v567
    %v573 = vpop.xlane.xlu0 %572
    %574 = vadd.xlane.f32.xlu0 %v569
    %v575 = vpop.xlane.xlu0 %574
    %576 = vadd.xlane.f32.xlu0 %v571
    %v577 = vpop.xlane.xlu0 %576
    %v578 = vlog2.pop %v573
    %v579 = vmul.f32 %v578, 0.6931472
    %v580 = vlog2.pop %v575
    %v581 = vmul.f32 %v580, 0.6931472
    %v582 = vlog2.pop %v577
    %v583 = vmul.f32 %v582, 0.6931472
    %v584 = vadd.f32 %v558, %v579
    %v585 = vadd.f32 %v560, %v581
    %v586 = vadd.f32 %v562, %v583
    %v587 = vsub.f32 %v269, %v584
    %v588 = vsub.f32 %v270, %v585
    %v589 = vsub.f32 %v271, %v586
    %591 = vset.pattern.permute.xlu0 0
    %592 = vperm.xlu0 %591, %v587
    %v593 = vpop.permute.xlu0 %592
    %596 = vset.pattern.permute.xlu0 0
    %597 = vperm.xlu0 %596, %v588
    %v598 = vpop.permute.xlu0 %597
    %601 = vset.pattern.permute.xlu0 0
    %602 = vperm.xlu0 %601, %v589
    %v603 = vpop.permute.xlu0 %602
    %v605 = vadd.f32 %v230, %v593
    %v606 = vadd.f32 %v231, %v598
    %v607 = vadd.f32 %v232, %v603
    %v608 = vmax.f32 %v605, %v606
    %v609 = vmax.f32 %v608, %v607
    %v610 = vrot.slane %v609, 4
    %v611 = vmax.f32 %v609, %v610
    %v612 = vrot.slane %v611, 2
    %v613 = vmax.f32 %v611, %v612
    %v614 = vrot.slane %v613, 1
    %v615 = vmax.f32 %v613, %v614
    %v616 = vsub.f32 %v605, %v615
    %v617 = vsub.f32 %v606, %v615
    %v618 = vsub.f32 %v607, %v615
    %v619 = vmul.f32 %v616, 1.442695
    %v620 = vpow.pop %v619
    %v621 = vmul.f32 %v617, 1.442695
    %v622 = vpow.pop %v621
    %v623 = vmul.f32 %v618, 1.442695
    %v624 = vpow.pop %v623
    %v625 = vadd.f32 %v620, %v622
    %v626 = vadd.f32 %v625, %v624
    %v627 = vrot.slane %v626, 4
    %v628 = vadd.f32 %v626, %v627
    %v629 = vrot.slane %v628, 2
    %v630 = vadd.f32 %v628, %v629
    %v631 = vrot.slane %v630, 1
    %v632 = vadd.f32 %v630, %v631
    %v633 = vlog2.pop %v632
    %v634 = vmul.f32 %v633, 0.6931472
    %v635 = vadd.f32 %v615, %v634
    %v636 = vsub.f32 %v286, %v635
    %v638 = vlaneseq
    %v639 = vshrl.u32 %v638, 7
    %v640 = vsub.s32 0, %v639
    %v641 = vrot.slane %v636, %v640
    %v643 = vadd.f32 %v230, %v641
    %v644 = vadd.f32 %v231, %v641
    %v645 = vadd.f32 %v232, %v641
    %646 = vmax.xlane.f32.xlu0 %v643
    %v647 = vpop.xlane.xlu0 %646
    %648 = vmax.xlane.f32.xlu0 %v644
    %v649 = vpop.xlane.xlu0 %648
    %650 = vmax.xlane.f32.xlu0 %v645
    %v651 = vpop.xlane.xlu0 %650
    %v652 = vsub.f32 %v643, %v647
    %v653 = vsub.f32 %v644, %v649
    %v654 = vsub.f32 %v645, %v651
    %v655 = vmul.f32 %v652, 1.442695
    %v656 = vpow.pop %v655
    %v657 = vmul.f32 %v653, 1.442695
    %v658 = vpow.pop %v657
    %v659 = vmul.f32 %v654, 1.442695
    %v660 = vpow.pop %v659
    %661 = vadd.xlane.f32.xlu0 %v656
    %v662 = vpop.xlane.xlu0 %661
    %663 = vadd.xlane.f32.xlu0 %v658
    %v664 = vpop.xlane.xlu0 %663
    %665 = vadd.xlane.f32.xlu0 %v660
    %v666 = vpop.xlane.xlu0 %665
    %v667 = vlog2.pop %v662
    %v668 = vmul.f32 %v667, 0.6931472
    %v669 = vlog2.pop %v664
    %v670 = vmul.f32 %v669, 0.6931472
    %v671 = vlog2.pop %v666
    %v672 = vmul.f32 %v671, 0.6931472
    %v673 = vadd.f32 %v647, %v668
    %v674 = vadd.f32 %v649, %v670
    %v675 = vadd.f32 %v651, %v672
    %v676 = vsub.f32 %v269, %v673
    %v677 = vsub.f32 %v270, %v674
    %v678 = vsub.f32 %v271, %v675
    %680 = vset.pattern.permute.xlu0 0
    %681 = vperm.xlu0 %680, %v676
    %v682 = vpop.permute.xlu0 %681
    %685 = vset.pattern.permute.xlu0 0
    %686 = vperm.xlu0 %685, %v677
    %v687 = vpop.permute.xlu0 %686
    %690 = vset.pattern.permute.xlu0 0
    %691 = vperm.xlu0 %690, %v678
    %v692 = vpop.permute.xlu0 %691
    %v694 = vadd.f32 %v230, %v682
    %v695 = vadd.f32 %v231, %v687
    %v696 = vadd.f32 %v232, %v692
    %v697 = vmax.f32 %v694, %v695
    %v698 = vmax.f32 %v697, %v696
    %v699 = vrot.slane %v698, 4
    %v700 = vmax.f32 %v698, %v699
    %v701 = vrot.slane %v700, 2
    %v702 = vmax.f32 %v700, %v701
    %v703 = vrot.slane %v702, 1
    %v704 = vmax.f32 %v702, %v703
    %v705 = vsub.f32 %v694, %v704
    %v706 = vsub.f32 %v695, %v704
    %v707 = vsub.f32 %v696, %v704
    %v708 = vmul.f32 %v705, 1.442695
    %v709 = vpow.pop %v708
    %v710 = vmul.f32 %v706, 1.442695
    %v711 = vpow.pop %v710
    %v712 = vmul.f32 %v707, 1.442695
    %v713 = vpow.pop %v712
    %v714 = vadd.f32 %v709, %v711
    %v715 = vadd.f32 %v714, %v713
    %v716 = vrot.slane %v715, 4
    %v717 = vadd.f32 %v715, %v716
    %v718 = vrot.slane %v717, 2
    %v719 = vadd.f32 %v717, %v718
    %v720 = vrot.slane %v719, 1
    %v721 = vadd.f32 %v719, %v720
    %v722 = vlog2.pop %v721
    %v723 = vmul.f32 %v722, 0.6931472
    %v724 = vadd.f32 %v704, %v723
    %v725 = vsub.f32 %v286, %v724
    %v727 = vlaneseq
    %v728 = vshrl.u32 %v727, 7
    %v729 = vsub.s32 0, %v728
    %v730 = vrot.slane %v725, %v729
    %v732 = vadd.f32 %v230, %v730
    %v733 = vadd.f32 %v231, %v730
    %v734 = vadd.f32 %v232, %v730
    %735 = vmax.xlane.f32.xlu0 %v732
    %v736 = vpop.xlane.xlu0 %735
    %737 = vmax.xlane.f32.xlu0 %v733
    %v738 = vpop.xlane.xlu0 %737
    %739 = vmax.xlane.f32.xlu0 %v734
    %v740 = vpop.xlane.xlu0 %739
    %v741 = vsub.f32 %v732, %v736
    %v742 = vsub.f32 %v733, %v738
    %v743 = vsub.f32 %v734, %v740
    %v744 = vmul.f32 %v741, 1.442695
    %v745 = vpow.pop %v744
    %v746 = vmul.f32 %v742, 1.442695
    %v747 = vpow.pop %v746
    %v748 = vmul.f32 %v743, 1.442695
    %v749 = vpow.pop %v748
    %750 = vadd.xlane.f32.xlu0 %v745
    %v751 = vpop.xlane.xlu0 %750
    %752 = vadd.xlane.f32.xlu0 %v747
    %v753 = vpop.xlane.xlu0 %752
    %754 = vadd.xlane.f32.xlu0 %v749
    %v755 = vpop.xlane.xlu0 %754
    %v756 = vlog2.pop %v751
    %v757 = vmul.f32 %v756, 0.6931472
    %v758 = vlog2.pop %v753
    %v759 = vmul.f32 %v758, 0.6931472
    %v760 = vlog2.pop %v755
    %v761 = vmul.f32 %v760, 0.6931472
    %v762 = vadd.f32 %v736, %v757
    %v763 = vadd.f32 %v738, %v759
    %v764 = vadd.f32 %v740, %v761
    %v765 = vsub.f32 %v269, %v762
    %v766 = vsub.f32 %v270, %v763
    %v767 = vsub.f32 %v271, %v764
    %769 = vset.pattern.permute.xlu0 0
    %770 = vperm.xlu0 %769, %v765
    %v771 = vpop.permute.xlu0 %770
    %774 = vset.pattern.permute.xlu0 0
    %775 = vperm.xlu0 %774, %v766
    %v776 = vpop.permute.xlu0 %775
    %779 = vset.pattern.permute.xlu0 0
    %780 = vperm.xlu0 %779, %v767
    %v781 = vpop.permute.xlu0 %780
    %v783 = vadd.f32 %v230, %v771
    %v784 = vadd.f32 %v231, %v776
    %v785 = vadd.f32 %v232, %v781
    %v786 = vmax.f32 %v783, %v784
    %v787 = vmax.f32 %v786, %v785
    %v788 = vrot.slane %v787, 4
    %v789 = vmax.f32 %v787, %v788
    %v790 = vrot.slane %v789, 2
    %v791 = vmax.f32 %v789, %v790
    %v792 = vrot.slane %v791, 1
    %v793 = vmax.f32 %v791, %v792
    %v794 = vsub.f32 %v783, %v793
    %v795 = vsub.f32 %v784, %v793
    %v796 = vsub.f32 %v785, %v793
    %v797 = vmul.f32 %v794, 1.442695
    %v798 = vpow.pop %v797
    %v799 = vmul.f32 %v795, 1.442695
    %v800 = vpow.pop %v799
    %v801 = vmul.f32 %v796, 1.442695
    %v802 = vpow.pop %v801
    %v803 = vadd.f32 %v798, %v800
    %v804 = vadd.f32 %v803, %v802
    %v805 = vrot.slane %v804, 4
    %v806 = vadd.f32 %v804, %v805
    %v807 = vrot.slane %v806, 2
    %v808 = vadd.f32 %v806, %v807
    %v809 = vrot.slane %v808, 1
    %v810 = vadd.f32 %v808, %v809
    %v811 = vlog2.pop %v810
    %v812 = vmul.f32 %v811, 0.6931472
    %v813 = vadd.f32 %v793, %v812
    %v814 = vsub.f32 %v286, %v813
    %v816 = vlaneseq
    %v817 = vshrl.u32 %v816, 7
    %v818 = vsub.s32 0, %v817
    %v819 = vrot.slane %v814, %v818
    %v821 = vadd.f32 %v230, %v819
    %v822 = vadd.f32 %v231, %v819
    %v823 = vadd.f32 %v232, %v819
    %824 = vmax.xlane.f32.xlu0 %v821
    %v825 = vpop.xlane.xlu0 %824
    %826 = vmax.xlane.f32.xlu0 %v822
    %v827 = vpop.xlane.xlu0 %826
    %828 = vmax.xlane.f32.xlu0 %v823
    %v829 = vpop.xlane.xlu0 %828
    %v830 = vsub.f32 %v821, %v825
    %v831 = vsub.f32 %v822, %v827
    %v832 = vsub.f32 %v823, %v829
    %v833 = vmul.f32 %v830, 1.442695
    %v834 = vpow.pop %v833
    %v835 = vmul.f32 %v831, 1.442695
    %v836 = vpow.pop %v835
    %v837 = vmul.f32 %v832, 1.442695
    %v838 = vpow.pop %v837
    %839 = vadd.xlane.f32.xlu0 %v834
    %v840 = vpop.xlane.xlu0 %839
    %841 = vadd.xlane.f32.xlu0 %v836
    %v842 = vpop.xlane.xlu0 %841
    %843 = vadd.xlane.f32.xlu0 %v838
    %v844 = vpop.xlane.xlu0 %843
    %v845 = vlog2.pop %v840
    %v846 = vmul.f32 %v845, 0.6931472
    %v847 = vlog2.pop %v842
    %v848 = vmul.f32 %v847, 0.6931472
    %v849 = vlog2.pop %v844
    %v850 = vmul.f32 %v849, 0.6931472
    %v851 = vadd.f32 %v825, %v846
    %v852 = vadd.f32 %v827, %v848
    %v853 = vadd.f32 %v829, %v850
    %v854 = vsub.f32 %v269, %v851
    %v855 = vsub.f32 %v270, %v852
    %v856 = vsub.f32 %v271, %v853
    %858 = vset.pattern.permute.xlu0 0
    %859 = vperm.xlu0 %858, %v854
    %v860 = vpop.permute.xlu0 %859
    %863 = vset.pattern.permute.xlu0 0
    %864 = vperm.xlu0 %863, %v855
    %v865 = vpop.permute.xlu0 %864
    %868 = vset.pattern.permute.xlu0 0
    %869 = vperm.xlu0 %868, %v856
    %v870 = vpop.permute.xlu0 %869
    %v872 = vadd.f32 %v230, %v860
    %v873 = vadd.f32 %v231, %v865
    %v874 = vadd.f32 %v232, %v870
    %v875 = vmax.f32 %v872, %v873
    %v876 = vmax.f32 %v875, %v874
    %v877 = vrot.slane %v876, 4
    %v878 = vmax.f32 %v876, %v877
    %v879 = vrot.slane %v878, 2
    %v880 = vmax.f32 %v878, %v879
    %v881 = vrot.slane %v880, 1
    %v882 = vmax.f32 %v880, %v881
    %v883 = vsub.f32 %v872, %v882
    %v884 = vsub.f32 %v873, %v882
    %v885 = vsub.f32 %v874, %v882
    %v886 = vmul.f32 %v883, 1.442695
    %v887 = vpow.pop %v886
    %v888 = vmul.f32 %v884, 1.442695
    %v889 = vpow.pop %v888
    %v890 = vmul.f32 %v885, 1.442695
    %v891 = vpow.pop %v890
    %v892 = vadd.f32 %v887, %v889
    %v893 = vadd.f32 %v892, %v891
    %v894 = vrot.slane %v893, 4
    %v895 = vadd.f32 %v893, %v894
    %v896 = vrot.slane %v895, 2
    %v897 = vadd.f32 %v895, %v896
    %v898 = vrot.slane %v897, 1
    %v899 = vadd.f32 %v897, %v898
    %v900 = vlog2.pop %v899
    %v901 = vmul.f32 %v900, 0.6931472
    %v902 = vadd.f32 %v882, %v901
    %v903 = vsub.f32 %v286, %v902
    %v905 = vlaneseq
    %v906 = vshrl.u32 %v905, 7
    %v907 = vsub.s32 0, %v906
    %v908 = vrot.slane %v903, %v907
    %v910 = vadd.f32 %v230, %v908
    %v911 = vadd.f32 %v231, %v908
    %v912 = vadd.f32 %v232, %v908
    %913 = vmax.xlane.f32.xlu0 %v910
    %v914 = vpop.xlane.xlu0 %913
    %915 = vmax.xlane.f32.xlu0 %v911
    %v916 = vpop.xlane.xlu0 %915
    %917 = vmax.xlane.f32.xlu0 %v912
    %v918 = vpop.xlane.xlu0 %917
    %v919 = vsub.f32 %v910, %v914
    %v920 = vsub.f32 %v911, %v916
    %v921 = vsub.f32 %v912, %v918
    %v922 = vmul.f32 %v919, 1.442695
    %v923 = vpow.pop %v922
    %v924 = vmul.f32 %v920, 1.442695
    %v925 = vpow.pop %v924
    %v926 = vmul.f32 %v921, 1.442695
    %v927 = vpow.pop %v926
    %928 = vadd.xlane.f32.xlu0 %v923
    %v929 = vpop.xlane.xlu0 %928
    %930 = vadd.xlane.f32.xlu0 %v925
    %v931 = vpop.xlane.xlu0 %930
    %932 = vadd.xlane.f32.xlu0 %v927
    %v933 = vpop.xlane.xlu0 %932
    %v934 = vlog2.pop %v929
    %v935 = vmul.f32 %v934, 0.6931472
    %v936 = vlog2.pop %v931
    %v937 = vmul.f32 %v936, 0.6931472
    %v938 = vlog2.pop %v933
    %v939 = vmul.f32 %v938, 0.6931472
    %v940 = vadd.f32 %v914, %v935
    %v941 = vadd.f32 %v916, %v937
    %v942 = vadd.f32 %v918, %v939
    %v943 = vsub.f32 %v269, %v940
    %v944 = vsub.f32 %v270, %v941
    %v945 = vsub.f32 %v271, %v942
    %947 = vset.pattern.permute.xlu0 0
    %948 = vperm.xlu0 %947, %v943
    %v949 = vpop.permute.xlu0 %948
    %952 = vset.pattern.permute.xlu0 0
    %953 = vperm.xlu0 %952, %v944
    %v954 = vpop.permute.xlu0 %953
    %957 = vset.pattern.permute.xlu0 0
    %958 = vperm.xlu0 %957, %v945
    %v959 = vpop.permute.xlu0 %958
    %v961 = vadd.f32 %v230, %v949
    %v962 = vadd.f32 %v231, %v954
    %v963 = vadd.f32 %v232, %v959
    %v964 = vmax.f32 %v961, %v962
    %v965 = vmax.f32 %v964, %v963
    %v966 = vrot.slane %v965, 4
    %v967 = vmax.f32 %v965, %v966
    %v968 = vrot.slane %v967, 2
    %v969 = vmax.f32 %v967, %v968
    %v970 = vrot.slane %v969, 1
    %v971 = vmax.f32 %v969, %v970
    %v972 = vsub.f32 %v961, %v971
    %v973 = vsub.f32 %v962, %v971
    %v974 = vsub.f32 %v963, %v971
    %v975 = vmul.f32 %v972, 1.442695
    %v976 = vpow.pop %v975
    %v977 = vmul.f32 %v973, 1.442695
    %v978 = vpow.pop %v977
    %v979 = vmul.f32 %v974, 1.442695
    %v980 = vpow.pop %v979
    %v981 = vadd.f32 %v976, %v978
    %v982 = vadd.f32 %v981, %v980
    %v983 = vrot.slane %v982, 4
    %v984 = vadd.f32 %v982, %v983
    %v985 = vrot.slane %v984, 2
    %v986 = vadd.f32 %v984, %v985
    %v987 = vrot.slane %v986, 1
    %v988 = vadd.f32 %v986, %v987
    %v989 = vlog2.pop %v988
    %v990 = vmul.f32 %v989, 0.6931472
    %v991 = vadd.f32 %v971, %v990
    %v992 = vsub.f32 %v286, %v991
    %v994 = vlaneseq
    %v995 = vshrl.u32 %v994, 7
    %v996 = vsub.s32 0, %v995
    %v997 = vrot.slane %v992, %v996
    %v999 = vadd.f32 %v230, %v997
    %v1000 = vadd.f32 %v231, %v997
    %v1001 = vadd.f32 %v232, %v997
    %1002 = vmax.xlane.f32.xlu0 %v999
    %v1003 = vpop.xlane.xlu0 %1002
    %1004 = vmax.xlane.f32.xlu0 %v1000
    %v1005 = vpop.xlane.xlu0 %1004
    %1006 = vmax.xlane.f32.xlu0 %v1001
    %v1007 = vpop.xlane.xlu0 %1006
    %v1008 = vsub.f32 %v999, %v1003
    %v1009 = vsub.f32 %v1000, %v1005
    %v1010 = vsub.f32 %v1001, %v1007
    %v1011 = vmul.f32 %v1008, 1.442695
    %v1012 = vpow.pop %v1011
    %v1013 = vmul.f32 %v1009, 1.442695
    %v1014 = vpow.pop %v1013
    %v1015 = vmul.f32 %v1010, 1.442695
    %v1016 = vpow.pop %v1015
    %1017 = vadd.xlane.f32.xlu0 %v1012
    %v1018 = vpop.xlane.xlu0 %1017
    %1019 = vadd.xlane.f32.xlu0 %v1014
    %v1020 = vpop.xlane.xlu0 %1019
    %1021 = vadd.xlane.f32.xlu0 %v1016
    %v1022 = vpop.xlane.xlu0 %1021
    %v1023 = vlog2.pop %v1018
    %v1024 = vmul.f32 %v1023, 0.6931472
    %v1025 = vlog2.pop %v1020
    %v1026 = vmul.f32 %v1025, 0.6931472
    %v1027 = vlog2.pop %v1022
    %v1028 = vmul.f32 %v1027, 0.6931472
    %v1029 = vadd.f32 %v1003, %v1024
    %v1030 = vadd.f32 %v1005, %v1026
    %v1031 = vadd.f32 %v1007, %v1028
    %v1032 = vsub.f32 %v269, %v1029
    %v1033 = vsub.f32 %v270, %v1030
    %v1034 = vsub.f32 %v271, %v1031
    %1036 = vset.pattern.permute.xlu0 0
    %1037 = vperm.xlu0 %1036, %v1032
    %v1038 = vpop.permute.xlu0 %1037
    %1041 = vset.pattern.permute.xlu0 0
    %1042 = vperm.xlu0 %1041, %v1033
    %v1043 = vpop.permute.xlu0 %1042
    %1046 = vset.pattern.permute.xlu0 0
    %1047 = vperm.xlu0 %1046, %v1034
    %v1048 = vpop.permute.xlu0 %1047
    %v1050 = vadd.f32 %v230, %v1038
    %v1051 = vadd.f32 %v231, %v1043
    %v1052 = vadd.f32 %v232, %v1048
    %v1053 = vmax.f32 %v1050, %v1051
    %v1054 = vmax.f32 %v1053, %v1052
    %v1055 = vrot.slane %v1054, 4
    %v1056 = vmax.f32 %v1054, %v1055
    %v1057 = vrot.slane %v1056, 2
    %v1058 = vmax.f32 %v1056, %v1057
    %v1059 = vrot.slane %v1058, 1
    %v1060 = vmax.f32 %v1058, %v1059
    %v1061 = vsub.f32 %v1050, %v1060
    %v1062 = vsub.f32 %v1051, %v1060
    %v1063 = vsub.f32 %v1052, %v1060
    %v1064 = vmul.f32 %v1061, 1.442695
    %v1065 = vpow.pop %v1064
    %v1066 = vmul.f32 %v1062, 1.442695
    %v1067 = vpow.pop %v1066
    %v1068 = vmul.f32 %v1063, 1.442695
    %v1069 = vpow.pop %v1068
    %v1070 = vadd.f32 %v1065, %v1067
    %v1071 = vadd.f32 %v1070, %v1069
    %v1072 = vrot.slane %v1071, 4
    %v1073 = vadd.f32 %v1071, %v1072
    %v1074 = vrot.slane %v1073, 2
    %v1075 = vadd.f32 %v1073, %v1074
    %v1076 = vrot.slane %v1075, 1
    %v1077 = vadd.f32 %v1075, %v1076
    %v1078 = vlog2.pop %v1077
    %v1079 = vmul.f32 %v1078, 0.6931472
    %v1080 = vadd.f32 %v1060, %v1079
    %v1081 = vsub.f32 %v286, %v1080
    %v1083 = vlaneseq
    %v1084 = vshrl.u32 %v1083, 7
    %v1085 = vsub.s32 0, %v1084
    %v1086 = vrot.slane %v1081, %v1085
    %v1088 = vadd.f32 %v230, %v1086
    %v1089 = vadd.f32 %v231, %v1086
    %v1090 = vadd.f32 %v232, %v1086
    %1091 = vmax.xlane.f32.xlu0 %v1088
    %v1092 = vpop.xlane.xlu0 %1091
    %1093 = vmax.xlane.f32.xlu0 %v1089
    %v1094 = vpop.xlane.xlu0 %1093
    %1095 = vmax.xlane.f32.xlu0 %v1090
    %v1096 = vpop.xlane.xlu0 %1095
    %v1097 = vsub.f32 %v1088, %v1092
    %v1098 = vsub.f32 %v1089, %v1094
    %v1099 = vsub.f32 %v1090, %v1096
    %v1100 = vmul.f32 %v1097, 1.442695
    %v1101 = vpow.pop %v1100
    %v1102 = vmul.f32 %v1098, 1.442695
    %v1103 = vpow.pop %v1102
    %v1104 = vmul.f32 %v1099, 1.442695
    %v1105 = vpow.pop %v1104
    %1106 = vadd.xlane.f32.xlu0 %v1101
    %v1107 = vpop.xlane.xlu0 %1106
    %1108 = vadd.xlane.f32.xlu0 %v1103
    %v1109 = vpop.xlane.xlu0 %1108
    %1110 = vadd.xlane.f32.xlu0 %v1105
    %v1111 = vpop.xlane.xlu0 %1110
    %v1112 = vlog2.pop %v1107
    %v1113 = vmul.f32 %v1112, 0.6931472
    %v1114 = vlog2.pop %v1109
    %v1115 = vmul.f32 %v1114, 0.6931472
    %v1116 = vlog2.pop %v1111
    %v1117 = vmul.f32 %v1116, 0.6931472
    %v1118 = vadd.f32 %v1092, %v1113
    %v1119 = vadd.f32 %v1094, %v1115
    %v1120 = vadd.f32 %v1096, %v1117
    %v1121 = vsub.f32 %v269, %v1118
    %v1122 = vsub.f32 %v270, %v1119
    %v1123 = vsub.f32 %v271, %v1120
    %1125 = vset.pattern.permute.xlu0 0
    %1126 = vperm.xlu0 %1125, %v1121
    %v1127 = vpop.permute.xlu0 %1126
    %1130 = vset.pattern.permute.xlu0 0
    %1131 = vperm.xlu0 %1130, %v1122
    %v1132 = vpop.permute.xlu0 %1131
    %1135 = vset.pattern.permute.xlu0 0
    %1136 = vperm.xlu0 %1135, %v1123
    %v1137 = vpop.permute.xlu0 %1136
    %v1139 = vadd.f32 %v230, %v1127
    %v1140 = vadd.f32 %v231, %v1132
    %v1141 = vadd.f32 %v232, %v1137
    %v1142 = vmax.f32 %v1139, %v1140
    %v1143 = vmax.f32 %v1142, %v1141
    %v1144 = vrot.slane %v1143, 4
    %v1145 = vmax.f32 %v1143, %v1144
    %v1146 = vrot.slane %v1145, 2
    %v1147 = vmax.f32 %v1145, %v1146
    %v1148 = vrot.slane %v1147, 1
    %v1149 = vmax.f32 %v1147, %v1148
    %v1150 = vsub.f32 %v1139, %v1149
    %v1151 = vsub.f32 %v1140, %v1149
    %v1152 = vsub.f32 %v1141, %v1149
    %v1153 = vmul.f32 %v1150, 1.442695
    %v1154 = vpow.pop %v1153
    %v1155 = vmul.f32 %v1151, 1.442695
    %v1156 = vpow.pop %v1155
    %v1157 = vmul.f32 %v1152, 1.442695
    %v1158 = vpow.pop %v1157
    %v1159 = vadd.f32 %v1154, %v1156
    %v1160 = vadd.f32 %v1159, %v1158
    %v1161 = vrot.slane %v1160, 4
    %v1162 = vadd.f32 %v1160, %v1161
    %v1163 = vrot.slane %v1162, 2
    %v1164 = vadd.f32 %v1162, %v1163
    %v1165 = vrot.slane %v1164, 1
    %v1166 = vadd.f32 %v1164, %v1165
    %v1167 = vlog2.pop %v1166
    %v1168 = vmul.f32 %v1167, 0.6931472
    %v1169 = vadd.f32 %v1149, %v1168
    %v1170 = vsub.f32 %v286, %v1169
    %v1172 = vlaneseq
    %v1173 = vshrl.u32 %v1172, 7
    %v1174 = vsub.s32 0, %v1173
    %v1175 = vrot.slane %v1170, %v1174
    %v1177 = vadd.f32 %v1139, %v1175
    %v1178 = vadd.f32 %v1140, %v1175
    %v1179 = vadd.f32 %v1141, %v1175
    %s1180 = vtos %v254
    %v1181 = vstv %s1180
    %v1183 = vsub.f32 %v1177, %v1181
    %v1184 = vsub.f32 %v1178, %v1181
    %v1185 = vsub.f32 %v1179, %v1181
    %1186 = vst [vmem:[#allocation3] sm:$0xff] %v1183
    %1187 = vst [vmem:[#allocation3 + $0x8] sm:$0xff] %v1184
    %1188 = vst [vmem:[#allocation3 + $0x10] sm:$0xff] %v1185
    // Predicated region
    $region22: #{tpu_custom_call.1} parent=1 // pred_check
      _
    $region23: #{tpu_custom_call.1} parent=1 // pred_check_branch
      %1190 = sbr.rel (0) target = $region25
    $region24: #{tpu_custom_call.1} parent=1 // pred_region
      %s1192 = ssub.s32 384, 384
      %1193 = vsyncadd [#allocation4], %s1192
      %s1194 = sshll.u32 [#allocation3], 4
      %s1195 = int_to_ptr.vmem [resolvable:$true] %s1194
      %1200 = dma.vmem_to_hbm [thread:$0]  %s1195, 384, %s5, [#allocation4], 128, 128, 8
    $region25: #{tpu_custom_call.1} parent=1 // pred_fallthru
      _
    // Predicated region
    $region26: #{tpu_custom_call.1} parent=1 // pred_check
      _
    $region27: #{tpu_custom_call.1} parent=1 // pred_check_branch
      %1202 = sbr.rel (0) target = $region29
    $region28: #{tpu_custom_call.1} parent=1 // pred_region
      %1203 = dma.done [#allocation4], 384
    $region29: #{tpu_custom_call.1} parent=1 // pred_fallthru
      _
    %1204 = vsyncpa [#allocation4], 1

</llo_original>
